<compile_context>
chip_gen: v6e
topology: v6e:2x2x1
jax: 0.10.0
libtpu: 0.0.40
codegen_flags: <defaults>
</compile_context>

<pallas_src>
import functools

import jax
import jax.numpy as jnp
from jax import lax
from jax.experimental import pallas as pl
from jax.experimental.pallas import tpu as pltpu


# ----------------------------------------------------------------------------
# Kernel
# ----------------------------------------------------------------------------
def _bottleneck_kernel(x_ref, w1_ref, b1_ref, w2_ref, b2_ref, mask_ref, o_ref,
                       *, pp, taps, use_residual):
    """Fused Bottleneck forward for one batch element.

    x_ref   : (1, Cin, Pp)        padded NCHW input, spatial flattened on lanes
    w1_ref  : (Cneck, 9*Cin)      conv1 weights (BN folded), taps packed in K
    b1_ref  : (Cneck, 1)          conv1 bias (BN folded, f32)
    w2_ref  : (Cout, 9*Cneck)     conv2 weights (BN folded), taps packed in K
    b2_ref  : (Cout, 1)           conv2 bias (BN folded, f32)
    mask_ref: (1, Pp)             1.0 at valid interior pixels, 0.0 at padding
    o_ref   : (1, Cout, Pp)       output (padded grid; wrapper crops interior)
    """
    x2d = x_ref[0]                                    # (Cin, Pp), model dtype

    def silu(a):
        return a * jax.nn.sigmoid(a)

    def conv3x3(inp, w_ref, b_ref):
        # im2col along K: 9 lane-rolled copies of `inp` (XLU rolls), stacked on
        # the sublane axis -> one MXU matmul with K = 9*C_in, N = Pp.
        slabs = [inp if s == 0 else pltpu.roll(inp, shift=(-s) % pp, axis=1)
                 for s in taps]
        cols = jnp.concatenate(slabs, axis=0)         # (9*C_in, Pp)
        acc = jnp.dot(w_ref[...], cols,
                      preferred_element_type=jnp.float32)   # (C_out, Pp) f32
        return acc + b_ref[...]

    # ---- conv1 + folded-BN bias + SiLU --------------------------------------
    a1 = conv3x3(x2d, w1_ref, b1_ref)
    y1 = silu(a1)
    # Zero the spatial halo / lane-pad positions (they act as conv2's zero
    # padding) and cast back to the model dtype for native MXU operands.
    y1 = (y1 * mask_ref[...]).astype(x2d.dtype)

    # ---- conv2 + folded-BN bias + SiLU --------------------------------------
    a2 = conv3x3(y1, w2_ref, b2_ref)
    y2 = silu(a2)

    # ---- residual ------------------------------------------------------------
    if use_residual:
        y2 = y2 + x2d.astype(jnp.float32)   # border lanes are cropped anyway

    o_ref[0] = y2.astype(o_ref.dtype)       # dense store: last dim = Pp (128k)


# ----------------------------------------------------------------------------
# Wrapper
# ----------------------------------------------------------------------------
def _fold_bn(w, gamma, beta, mean, var, eps=1e-5):
    """Fold BatchNorm (inference) into the preceding conv's weight/bias."""
    scale = gamma / jnp.sqrt(var + eps)                       # (Cout,)
    w_f = w * scale[:, None, None, None]                      # (Cout, Cin, 3, 3)
    b_f = beta - mean * scale                                  # (Cout,)
    return w_f, b_f


def bottleneck_forward(x, params, *, use_residual=True, groups=1, eps=1e-5):
    """x: (B, Cin, H, W) NCHW  ->  (B, Cout, H, W)."""
    assert groups == 1, "grouped expansion conv not implemented"
    B, Cin, H, W = x.shape
    Hp, Wp = H + 2, W + 2
    P = Hp * Wp
    Pp = ((P + 127) // 128) * 128            # lane-dense / aligned spatial axis

    w1f, b1f = _fold_bn(params["w1"], params["gamma1"], params["beta1"],
                        params["mean1"], params["var1"], eps)
    w2f, b2f = _fold_bn(params["w2"], params["gamma2"], params["beta2"],
                        params["mean2"], params["var2"], eps)
    Cneck = w1f.shape[0]
    Cout = w2f.shape[0]
    if use_residual:
        assert Cin == Cout, "residual requires in_channels == out_channels"

    cdtype = x.dtype
    # (O, I, 3, 3) -> (O, kh, kw, I) -> (O, 9*I); tap index = kh*3 + kw.
    w1_lhs = jnp.transpose(w1f, (0, 2, 3, 1)).reshape(Cneck, 9 * Cin).astype(cdtype)
    w2_lhs = jnp.transpose(w2f, (0, 2, 3, 1)).reshape(Cout, 9 * Cneck).astype(cdtype)
    b1_col = b1f.reshape(Cneck, 1).astype(jnp.float32)
    b2_col = b2f.reshape(Cout, 1).astype(jnp.float32)

    # Zero-pad spatial borders in NCHW, flatten (Hp, Wp) onto the lane axis and
    # pad the lane count to a multiple of 128.
    x_sp = jnp.pad(x, ((0, 0), (0, 0), (1, 1), (1, 1))).reshape(B, Cin, P)
    x_flat = jnp.pad(x_sp, ((0, 0), (0, 0), (0, Pp - P)))

    interior = jnp.zeros((Hp, Wp), jnp.float32).at[1:H + 1, 1:W + 1].set(1.0)
    mask = jnp.zeros((1, Pp), jnp.float32).at[0, :P].set(interior.reshape(P))

    # Flattened offsets of the 9 taps relative to the output pixel.
    taps = tuple((dh - 1) * Wp + (dw - 1) for dh in range(3) for dw in range(3))

    kernel = functools.partial(_bottleneck_kernel, pp=Pp, taps=taps,
                               use_residual=use_residual)

    # VMEM budget derived from the actual per-step buffers (with headroom),
    # capped below every generation's physical VMEM (v7x: 64 MiB).
    isz = jnp.dtype(cdtype).itemsize
    per_step_bytes = (
        2 * Cin * Pp * isz                              # double-buffered input
        + 2 * Cout * Pp * isz                           # double-buffered output
        + 2 * (Cneck * 9 * Cin + Cout * 9 * Cneck) * isz  # resident weights
        + 9 * Cin * Pp * isz + 9 * Cneck * Pp * isz     # im2col slabs
        + 4 * (Cneck + Cout) * Pp * 4                   # f32 activations/accums
        + Pp * 4                                        # mask
    )
    vmem_limit = int(min(64 * 2 ** 20, max(32 * 2 ** 20, 2 * per_step_bytes)))

    out_flat = pl.pallas_call(
        kernel,
        out_shape=jax.ShapeDtypeStruct((B, Cout, Pp), x.dtype),
        grid_spec=pltpu.PrefetchScalarGridSpec(
            num_scalar_prefetch=0,
            grid=(B,),
            in_specs=[
                pl.BlockSpec((1, Cin, Pp), lambda b: (b, 0, 0)),
                pl.BlockSpec((Cneck, 9 * Cin), lambda b: (0, 0)),
                pl.BlockSpec((Cneck, 1), lambda b: (0, 0)),
                pl.BlockSpec((Cout, 9 * Cneck), lambda b: (0, 0)),
                pl.BlockSpec((Cout, 1), lambda b: (0, 0)),
                pl.BlockSpec((1, Pp), lambda b: (0, 0)),
            ],
            out_specs=pl.BlockSpec((1, Cout, Pp), lambda b: (b, 0, 0)),
        ),
        compiler_params=pltpu.CompilerParams(
            dimension_semantics=("parallel",),
            vmem_limit_bytes=vmem_limit,
        ),
    )(x_flat, w1_lhs, b1_col, w2_lhs, b2_col, mask)

    # Crop the lane-pad tail and the 1-pixel spatial halo; already NCHW.
    out = out_flat[:, :, :P].reshape(B, Cout, Hp, Wp)[:, :, 1:H + 1, 1:W + 1]
    return out


# ----------------------------------------------------------------------------
# Pure-JAX reference (mirrors the PyTorch module, inference BN)
# ----------------------------------------------------------------------------
def bottleneck_reference(x, params, *, use_residual=True, eps=1e-5):
    def conv_bn_silu(h, w, gamma, beta, mean, var):
        y = lax.conv_general_dilated(
            h.astype(jnp.float32), w.astype(jnp.float32),
            window_strides=(1, 1), padding=((1, 1), (1, 1)),
            dimension_numbers=("NCHW", "OIHW", "NCHW"))
        scale = (gamma / jnp.sqrt(var + eps))[None, :, None, None]
        bias = (beta - mean * gamma / jnp.sqrt(var + eps))[None, :, None, None]
        y = y * scale + bias
        return y * jax.nn.sigmoid(y)

    y1 = conv_bn_silu(x, params["w1"], params["gamma1"], params["beta1"],
                      params["mean1"], params["var1"])
    y2 = conv_bn_silu(y1, params["w2"], params["gamma2"], params["beta2"],
                      params["mean2"], params["var2"])
    if use_residual:
        y2 = y2 + x
    return y2.astype(x.dtype)


# ----------------------------------------------------------------------------
if __name__ == "__main__":
    key = jax.random.PRNGKey(0)
    B, Cin, H, W = 2, 32, 16, 16
    Cout = Cin                      # residual requires in == out
    expansion_ratio = 0.5
    Cneck = int(Cout * expansion_ratio)

    ks = jax.random.split(key, 11)
    x = jax.random.normal(ks[0], (B, Cin, H, W), jnp.float32)

    params = dict(
        w1=jax.random.normal(ks[1], (Cneck, Cin, 3, 3), jnp.float32) * 0.05,
        gamma1=1.0 + 0.1 * jax.random.normal(ks[2], (Cneck,), jnp.float32),
        beta1=0.1 * jax.random.normal(ks[3], (Cneck,), jnp.float32),
        mean1=0.1 * jax.random.normal(ks[4], (Cneck,), jnp.float32),
        var1=jax.random.uniform(ks[5], (Cneck,), jnp.float32, 0.5, 1.5),
        w2=jax.random.normal(ks[6], (Cout, Cneck, 3, 3), jnp.float32) * 0.05,
        gamma2=1.0 + 0.1 * jax.random.normal(ks[7], (Cout,), jnp.float32),
        beta2=0.1 * jax.random.normal(ks[8], (Cout,), jnp.float32),
        mean2=0.1 * jax.random.normal(ks[9], (Cout,), jnp.float32),
        var2=jax.random.uniform(ks[10], (Cout,), jnp.float32, 0.5, 1.5),
    )

    out = bottleneck_forward(x, params, use_residual=True)
    out = jax.block_until_ready(out)

    ref = bottleneck_reference(x, params, use_residual=True)
    assert out.shape == (B, Cout, H, W), out.shape
    max_err = float(jnp.max(jnp.abs(out - ref)))
    assert jnp.allclose(out, ref, atol=2e-3, rtol=2e-3), f"mismatch vs ref: {max_err}"

    print("KERNEL_OK")
</pallas_src>

<mosaic_0001>
module attributes {stable_mosaic.version = 11 : i64} {
  func.func @_bottleneck_kernel(%arg0: i32, %arg1: memref<1x32x384xf32, #tpu.memory_space<vmem>>, %arg2: memref<16x288xf32, #tpu.memory_space<vmem>>, %arg3: memref<16x1xf32, #tpu.memory_space<vmem>>, %arg4: memref<32x144xf32, #tpu.memory_space<vmem>>, %arg5: memref<32x1xf32, #tpu.memory_space<vmem>>, %arg6: memref<1x384xf32, #tpu.memory_space<vmem>>, %arg7: memref<1x32x384xf32, #tpu.memory_space<vmem>>) attributes {dimension_semantics = [#tpu.dimension_semantics<parallel>], iteration_bounds = array<i64: 2>, scalar_prefetch = 0 : i64, scratch_operands = 0 : i64, tpu.core_type = #tpu.core_type<tc>, window_params = [{transform_indices = @transform_0, window_bounds = array<i64: 1, 32, 384>}, {pipeline_mode = #tpu.pipeline_mode<synchronous>, transform_indices = @transform_1, window_bounds = array<i64: 16, 288>}, {pipeline_mode = #tpu.pipeline_mode<synchronous>, transform_indices = @transform_2, window_bounds = array<i64: 16, 1>}, {pipeline_mode = #tpu.pipeline_mode<synchronous>, transform_indices = @transform_3, window_bounds = array<i64: 32, 144>}, {pipeline_mode = #tpu.pipeline_mode<synchronous>, transform_indices = @transform_4, window_bounds = array<i64: 32, 1>}, {pipeline_mode = #tpu.pipeline_mode<synchronous>, transform_indices = @transform_5, window_bounds = array<i64: 1, 384>}, {transform_indices = @transform_6, window_bounds = array<i64: 1, 32, 384>}]} {
    %c0 = arith.constant 0 : index
    %c0_0 = arith.constant 0 : index
    %c0_1 = arith.constant 0 : index
    %0 = vector.load %arg1[%c0, %c0_0, %c0_1] : memref<1x32x384xf32, #tpu.memory_space<vmem>>, vector<1x32x384xf32>
    %1 = vector.shape_cast %0 : vector<1x32x384xf32> to vector<32x384xf32>
    %c19_i32 = arith.constant 19 : i32
    %2 = tpu.dynamic_rotate %1 by %c19_i32 dim 1 : vector<32x384xf32>, i32 -> vector<32x384xf32>
    %c18_i32 = arith.constant 18 : i32
    %3 = tpu.dynamic_rotate %1 by %c18_i32 dim 1 : vector<32x384xf32>, i32 -> vector<32x384xf32>
    %c17_i32 = arith.constant 17 : i32
    %4 = tpu.dynamic_rotate %1 by %c17_i32 dim 1 : vector<32x384xf32>, i32 -> vector<32x384xf32>
    %c1_i32 = arith.constant 1 : i32
    %5 = tpu.dynamic_rotate %1 by %c1_i32 dim 1 : vector<32x384xf32>, i32 -> vector<32x384xf32>
    %c383_i32 = arith.constant 383 : i32
    %6 = tpu.dynamic_rotate %1 by %c383_i32 dim 1 : vector<32x384xf32>, i32 -> vector<32x384xf32>
    %c367_i32 = arith.constant 367 : i32
    %7 = tpu.dynamic_rotate %1 by %c367_i32 dim 1 : vector<32x384xf32>, i32 -> vector<32x384xf32>
    %c366_i32 = arith.constant 366 : i32
    %8 = tpu.dynamic_rotate %1 by %c366_i32 dim 1 : vector<32x384xf32>, i32 -> vector<32x384xf32>
    %c365_i32 = arith.constant 365 : i32
    %9 = tpu.dynamic_rotate %1 by %c365_i32 dim 1 : vector<32x384xf32>, i32 -> vector<32x384xf32>
    %10 = tpu.concatenate %2, %3, %4, %5, %1, %6, %7, %8, %9 in 0 : vector<32x384xf32>, vector<32x384xf32>, vector<32x384xf32>, vector<32x384xf32>, vector<32x384xf32>, vector<32x384xf32>, vector<32x384xf32>, vector<32x384xf32>, vector<32x384xf32> -> vector<288x384xf32>
    %c0_2 = arith.constant 0 : index
    %c0_3 = arith.constant 0 : index
    %11 = vector.load %arg2[%c0_2, %c0_3] : memref<16x288xf32, #tpu.memory_space<vmem>>, vector<16x288xf32>
    %cst = arith.constant dense<0.000000e+00> : vector<16x384xf32>
    %12 = tpu.matmul %11, %10, %cst {dimension_numbers = #tpu.dot_dimension_numbers<[1], [0], [0], [1], [0, 0, 1, 1], [], []>} : vector<16x288xf32>, vector<288x384xf32>, vector<16x384xf32> -> vector<16x384xf32>
    %c0_4 = arith.constant 0 : index
    %c0_5 = arith.constant 0 : index
    %13 = vector.load %arg3[%c0_4, %c0_5] : memref<16x1xf32, #tpu.memory_space<vmem>>, vector<16x1xf32>
    %14 = vector.broadcast %13 : vector<16x1xf32> to vector<16x384xf32>
    %15 = arith.addf %12, %14 : vector<16x384xf32>
    %16 = arith.negf %15 : vector<16x384xf32>
    %17 = math.exp %16 : vector<16x384xf32>
    %cst_6 = arith.constant 1.000000e+00 : f32
    %18 = vector.broadcast %cst_6 : f32 to vector<16x384xf32>
    %19 = arith.addf %18, %17 : vector<16x384xf32>
    %20 = arith.divf %18, %19 : vector<16x384xf32>
    %21 = arith.mulf %15, %20 : vector<16x384xf32>
    %c0_7 = arith.constant 0 : index
    %c0_8 = arith.constant 0 : index
    %22 = vector.load %arg6[%c0_7, %c0_8] : memref<1x384xf32, #tpu.memory_space<vmem>>, vector<1x384xf32>
    %23 = vector.broadcast %22 : vector<1x384xf32> to vector<16x384xf32>
    %24 = arith.mulf %21, %23 : vector<16x384xf32>
    %c19_i32_9 = arith.constant 19 : i32
    %25 = tpu.dynamic_rotate %24 by %c19_i32_9 dim 1 : vector<16x384xf32>, i32 -> vector<16x384xf32>
    %c18_i32_10 = arith.constant 18 : i32
    %26 = tpu.dynamic_rotate %24 by %c18_i32_10 dim 1 : vector<16x384xf32>, i32 -> vector<16x384xf32>
    %c17_i32_11 = arith.constant 17 : i32
    %27 = tpu.dynamic_rotate %24 by %c17_i32_11 dim 1 : vector<16x384xf32>, i32 -> vector<16x384xf32>
    %c1_i32_12 = arith.constant 1 : i32
    %28 = tpu.dynamic_rotate %24 by %c1_i32_12 dim 1 : vector<16x384xf32>, i32 -> vector<16x384xf32>
    %c383_i32_13 = arith.constant 383 : i32
    %29 = tpu.dynamic_rotate %24 by %c383_i32_13 dim 1 : vector<16x384xf32>, i32 -> vector<16x384xf32>
    %c367_i32_14 = arith.constant 367 : i32
    %30 = tpu.dynamic_rotate %24 by %c367_i32_14 dim 1 : vector<16x384xf32>, i32 -> vector<16x384xf32>
    %c366_i32_15 = arith.constant 366 : i32
    %31 = tpu.dynamic_rotate %24 by %c366_i32_15 dim 1 : vector<16x384xf32>, i32 -> vector<16x384xf32>
    %c365_i32_16 = arith.constant 365 : i32
    %32 = tpu.dynamic_rotate %24 by %c365_i32_16 dim 1 : vector<16x384xf32>, i32 -> vector<16x384xf32>
    %33 = tpu.concatenate %25, %26, %27, %28, %24, %29, %30, %31, %32 in 0 : vector<16x384xf32>, vector<16x384xf32>, vector<16x384xf32>, vector<16x384xf32>, vector<16x384xf32>, vector<16x384xf32>, vector<16x384xf32>, vector<16x384xf32>, vector<16x384xf32> -> vector<144x384xf32>
    %c0_17 = arith.constant 0 : index
    %c0_18 = arith.constant 0 : index
    %34 = vector.load %arg4[%c0_17, %c0_18] : memref<32x144xf32, #tpu.memory_space<vmem>>, vector<32x144xf32>
    %cst_19 = arith.constant dense<0.000000e+00> : vector<32x384xf32>
    %35 = tpu.matmul %34, %33, %cst_19 {dimension_numbers = #tpu.dot_dimension_numbers<[1], [0], [0], [1], [0, 0, 1, 1], [], []>} : vector<32x144xf32>, vector<144x384xf32>, vector<32x384xf32> -> vector<32x384xf32>
    %c0_20 = arith.constant 0 : index
    %c0_21 = arith.constant 0 : index
    %36 = vector.load %arg5[%c0_20, %c0_21] : memref<32x1xf32, #tpu.memory_space<vmem>>, vector<32x1xf32>
    %37 = vector.broadcast %36 : vector<32x1xf32> to vector<32x384xf32>
    %38 = arith.addf %35, %37 : vector<32x384xf32>
    %39 = arith.negf %38 : vector<32x384xf32>
    %40 = math.exp %39 : vector<32x384xf32>
    %cst_22 = arith.constant 1.000000e+00 : f32
    %41 = vector.broadcast %cst_22 : f32 to vector<32x384xf32>
    %42 = arith.addf %41, %40 : vector<32x384xf32>
    %43 = arith.divf %41, %42 : vector<32x384xf32>
    %44 = arith.mulf %38, %43 : vector<32x384xf32>
    %45 = arith.addf %44, %1 : vector<32x384xf32>
    %c0_23 = arith.constant 0 : index
    %c0_24 = arith.constant 0 : index
    %c0_25 = arith.constant 0 : index
    %46 = vector.load %arg7[%c0_23, %c0_24, %c0_25] : memref<1x32x384xf32, #tpu.memory_space<vmem>>, vector<1x32x384xf32>
    %47 = vector.shape_cast %46 : vector<1x32x384xf32> to vector<32x384xf32>
    %48 = vector.shape_cast %45 : vector<32x384xf32> to vector<1x32x384xf32>
    tpu.vector_store %arg7[%c0_23, %c0_24, %c0_25], %48 {strides = array<i32>} : memref<1x32x384xf32, #tpu.memory_space<vmem>>, vector<1x32x384xf32>,
    return
  }
  func.func @transform_0(%arg0: i32) -> (i32, i32, i32) {
    %c0_i32 = arith.constant 0 : i32
    %c0_i32_0 = arith.constant 0 : i32
    %c0_i32_1 = arith.constant 0 : i32
    return %arg0, %c0_i32, %c0_i32_0 : i32, i32, i32
  }
  func.func @transform_1(%arg0: i32) -> (i32, i32) {
    %c0_i32 = arith.constant 0 : i32
    %c0_i32_0 = arith.constant 0 : i32
    %c0_i32_1 = arith.constant 0 : i32
    return %c0_i32, %c0_i32_0 : i32, i32
  }
  func.func @transform_2(%arg0: i32) -> (i32, i32) {
    %c0_i32 = arith.constant 0 : i32
    %c0_i32_0 = arith.constant 0 : i32
    %c0_i32_1 = arith.constant 0 : i32
    return %c0_i32, %c0_i32_0 : i32, i32
  }
  func.func @transform_3(%arg0: i32) -> (i32, i32) {
    %c0_i32 = arith.constant 0 : i32
    %c0_i32_0 = arith.constant 0 : i32
    %c0_i32_1 = arith.constant 0 : i32
    return %c0_i32, %c0_i32_0 : i32, i32
  }
  func.func @transform_4(%arg0: i32) -> (i32, i32) {
    %c0_i32 = arith.constant 0 : i32
    %c0_i32_0 = arith.constant 0 : i32
    %c0_i32_1 = arith.constant 0 : i32
    return %c0_i32, %c0_i32_0 : i32, i32
  }
  func.func @transform_5(%arg0: i32) -> (i32, i32) {
    %c0_i32 = arith.constant 0 : i32
    %c0_i32_0 = arith.constant 0 : i32
    %c0_i32_1 = arith.constant 0 : i32
    return %c0_i32, %c0_i32_0 : i32, i32
  }
  func.func @transform_6(%arg0: i32) -> (i32, i32, i32) {
    %c0_i32 = arith.constant 0 : i32
    %c0_i32_0 = arith.constant 0 : i32
    %c0_i32_1 = arith.constant 0 : i32
    return %arg0, %c0_i32, %c0_i32_0 : i32, i32, i32
  }
}

</mosaic_0001>

<llo_original>
// kernel: tpu_custom_call.1
$region0: #{tpu_custom_call.1}
  #allocation0 [shape = 'u32[]', space=smem, size = 0x4, offset = 0x4, fixed_abs, tag = 'smem constant byte address 0x4 - core index']
  #allocation1 [shape = 'u32[144,128]{1,0:T(1,128)}', space=vmem, size = 0x12000, scoped, tag = 'internal scratch']
  %s0 = inlined_call_operand.hbm [shape: f32[2,32,384], index: 0, kind: input, shape index: {}]
  %s1 = inlined_call_operand.vmem [shape: f32[16,288], index: 1, kind: input, shape index: {}]
  %s2 = inlined_call_operand.vmem [shape: f32[16,1], index: 2, kind: input, shape index: {}]
  %s3 = inlined_call_operand.hbm [shape: f32[32,144], index: 3, kind: input, shape index: {}]
  %s4 = inlined_call_operand.vmem [shape: f32[32,1], index: 4, kind: input, shape index: {}]
  %s5 = inlined_call_operand.vmem [shape: f32[1,384], index: 5, kind: input, shape index: {}]
  %s6 = inlined_call_operand.hbm [shape: f32[2,32,384], index: 6, kind: output, shape index: {}]
  %s7 = sld [smem:[#allocation0]]
  $region65: #{tpu_custom_call.1} parent=0
    _
  %s9 = ssub.s32 1, %s7
  %s10 = scalar_select 0, %s9, %s7
  $region1: #{tpu_custom_call.1} parent=0
    #allocation2 [shape = 'u8[98304]{0}', space=vmem, size = 0x18000, scoped, tag = 'input window, operand 0']
    #allocation3 [shape = 's32[2]{0}', space=sflag, size = 0x8, scoped, tag = 'scoped memory for tpu_custom_call.1']
    #allocation4 [shape = 's32[2]{0}', space=sflag, size = 0x8, scoped, tag = 'scoped memory for tpu_custom_call.1']
    #allocation5 [shape = 'u8[32768]{0}', space=vmem, size = 0x8000, scoped, tag = 'input window, operand 3, single buffered']
    #allocation6 [shape = 's32[1]{0}', space=sflag, size = 0x4, scoped, tag = 'scoped memory for tpu_custom_call.1']
    #allocation7 [shape = 'u8[98304]{0}', space=vmem, size = 0x18000, scoped, tag = 'output window, operand 0']
    %11 = vsyncpa [#allocation3], 0
    %s12 = scalar_lea.sflag [#allocation3], 1
    %13 = vsyncpa %s12, 0
    %14 = vsyncpa [#allocation6], 0
    %15 = vsyncpa [#allocation4], 0
    %s16 = scalar_lea.sflag [#allocation4], 1
    %17 = vsyncpa %s16, 0
    loop: start=0, step=1, limit=4
    $region2: #{tpu_custom_call.1} parent=1 // loop_pre_header
      _
    $region3: #{tpu_custom_call.1} parent=1 // loop_header
      %s19 = sphi 0, %s23
      %p20 = scmp.ge.s32.totalorder %s19, 4
      %s29 = sphi 0, %s31
      %s32 = sphi 0, %s29
      %s33 = sphi 0, %s32
      %s49 = sphi 0, %s33
      %s53 = sphi 0, %s53
      %s55 = sphi 0, %s53
      %s56 = sphi 0, %s55
      %s70 = sphi 0, %s56
      %s74 = sphi 0, %s74
      %s76 = sphi 0, %s74
      %s77 = sphi 0, %s76
      %s91 = sphi 0, %s77
      %s95 = sphi 0, %s95
      %s97 = sphi 0, %s95
      %s98 = sphi 0, %s97
      %s112 = sphi 0, %s98
      %s116 = sphi 0, %s116
      %s118 = sphi 0, %s116
      %s119 = sphi 0, %s118
      %s133 = sphi 0, %s119
      %s137 = sphi 0, %s137
      %s139 = sphi 0, %s137
      %s140 = sphi 0, %s139
      %s154 = sphi 0, %s140
      %s160 = sphi 0, %s162
      %s163 = sphi 0, %s160
      %s164 = sphi 0, %s163
      %s180 = sphi 0, %s164
    $region4: #{tpu_custom_call.1} parent=1 // loop_header_branch
      %22 = sbr.rel (%p20) target = $region8
    $region5: #{tpu_custom_call.1} parent=1 // loop_body
      %s24 = ssub.s32 %s19, 1
      %s25 = ssub.s32 %s19, 2
      %s26 = sadd.s32 %s19, 1
      %s27 = ssub.s32 %s19, %s26
      %p28 = scmp.eq.s32.totalorder %s27, 0
      %s30 = sadd.s32 %s29, 1
      %s31 = scalar_select %p28, %s29, %s30
      %p34 = pneg %p28
      %p35 = scmp.eq.s32.totalorder %s19, 1
      %p36 = por %p34, %p35
      %p37 = scmp.ne.s32.totalorder %s29, %s32
      %p38 = scmp.eq.s32.totalorder %s19, 0
      %p39 = por %p37, %p38
      %p40 = scmp.ne.s32.totalorder %s29, %s32
      %p41 = scmp.eq.s32.totalorder %s24, 1
      %p42 = por %p40, %p41
      %p43 = scmp.ne.s32.totalorder %s32, %s33
      %p44 = scmp.eq.s32.totalorder %s24, 0
      %p45 = por %p43, %p44
      %p46 = scmp.ne.s32.totalorder %s32, %s33
      %p47 = scmp.eq.s32.totalorder %s25, 1
      %p48 = por %p46, %p47
      %p50 = scmp.ne.s32.totalorder %s33, %s49
      %p51 = scmp.eq.s32.totalorder %s25, 0
      %p52 = por %p50, %p51
      %s54 = sadd.s32 %s53, 1
      %p57 = scmp.eq.s32.totalorder %s19, 1
      %p58 = scmp.ne.s32.totalorder %s53, %s55
      %p59 = scmp.eq.s32.totalorder %s19, 0
      %p60 = por %p58, %p59
      %p61 = scmp.ne.s32.totalorder %s53, %s55
      %p62 = scmp.eq.s32.totalorder %s24, 1
      %p63 = por %p61, %p62
      %p64 = scmp.ne.s32.totalorder %s55, %s56
      %p65 = scmp.eq.s32.totalorder %s24, 0
      %p66 = por %p64, %p65
      %p67 = scmp.ne.s32.totalorder %s55, %s56
      %p68 = scmp.eq.s32.totalorder %s25, 1
      %p69 = por %p67, %p68
      %p71 = scmp.ne.s32.totalorder %s56, %s70
      %p72 = scmp.eq.s32.totalorder %s25, 0
      %p73 = por %p71, %p72
      %s75 = sadd.s32 %s74, 1
      %p78 = scmp.eq.s32.totalorder %s19, 1
      %p79 = scmp.ne.s32.totalorder %s74, %s76
      %p80 = scmp.eq.s32.totalorder %s19, 0
      %p81 = por %p79, %p80
      %p82 = scmp.ne.s32.totalorder %s74, %s76
      %p83 = scmp.eq.s32.totalorder %s24, 1
      %p84 = por %p82, %p83
      %p85 = scmp.ne.s32.totalorder %s76, %s77
      %p86 = scmp.eq.s32.totalorder %s24, 0
      %p87 = por %p85, %p86
      %p88 = scmp.ne.s32.totalorder %s76, %s77
      %p89 = scmp.eq.s32.totalorder %s25, 1
      %p90 = por %p88, %p89
      %p92 = scmp.ne.s32.totalorder %s77, %s91
      %p93 = scmp.eq.s32.totalorder %s25, 0
      %p94 = por %p92, %p93
      %s96 = sadd.s32 %s95, 1
      %p99 = scmp.eq.s32.totalorder %s19, 1
      %p100 = scmp.ne.s32.totalorder %s95, %s97
      %p101 = scmp.eq.s32.totalorder %s19, 0
      %p102 = por %p100, %p101
      %p103 = scmp.ne.s32.totalorder %s95, %s97
      %p104 = scmp.eq.s32.totalorder %s24, 1
      %p105 = por %p103, %p104
      %p106 = scmp.ne.s32.totalorder %s97, %s98
      %p107 = scmp.eq.s32.totalorder %s24, 0
      %p108 = por %p106, %p107
      %p109 = scmp.ne.s32.totalorder %s97, %s98
      %p110 = scmp.eq.s32.totalorder %s25, 1
      %p111 = por %p109, %p110
      %p113 = scmp.ne.s32.totalorder %s98, %s112
      %p114 = scmp.eq.s32.totalorder %s25, 0
      %p115 = por %p113, %p114
      %s117 = sadd.s32 %s116, 1
      %p120 = scmp.eq.s32.totalorder %s19, 1
      %p121 = scmp.ne.s32.totalorder %s116, %s118
      %p122 = scmp.eq.s32.totalorder %s19, 0
      %p123 = por %p121, %p122
      %p124 = scmp.ne.s32.totalorder %s116, %s118
      %p125 = scmp.eq.s32.totalorder %s24, 1
      %p126 = por %p124, %p125
      %p127 = scmp.ne.s32.totalorder %s118, %s119
      %p128 = scmp.eq.s32.totalorder %s24, 0
      %p129 = por %p127, %p128
      %p130 = scmp.ne.s32.totalorder %s118, %s119
      %p131 = scmp.eq.s32.totalorder %s25, 1
      %p132 = por %p130, %p131
      %p134 = scmp.ne.s32.totalorder %s119, %s133
      %p135 = scmp.eq.s32.totalorder %s25, 0
      %p136 = por %p134, %p135
      %s138 = sadd.s32 %s137, 1
      %p141 = scmp.eq.s32.totalorder %s19, 1
      %p142 = scmp.ne.s32.totalorder %s137, %s139
      %p143 = scmp.eq.s32.totalorder %s19, 0
      %p144 = por %p142, %p143
      %p145 = scmp.ne.s32.totalorder %s137, %s139
      %p146 = scmp.eq.s32.totalorder %s24, 1
      %p147 = por %p145, %p146
      %p148 = scmp.ne.s32.totalorder %s139, %s140
      %p149 = scmp.eq.s32.totalorder %s24, 0
      %p150 = por %p148, %p149
      %p151 = scmp.ne.s32.totalorder %s139, %s140
      %p152 = scmp.eq.s32.totalorder %s25, 1
      %p153 = por %p151, %p152
      %p155 = scmp.ne.s32.totalorder %s140, %s154
      %p156 = scmp.eq.s32.totalorder %s25, 0
      %p157 = por %p155, %p156
      %s158 = ssub.s32 %s19, %s26
      %p159 = scmp.eq.s32.totalorder %s158, 0
      %s161 = sadd.s32 %s160, 1
      %s162 = scalar_select %p159, %s160, %s161
      %p165 = pneg %p159
      %p166 = scmp.eq.s32.totalorder %s19, 1
      %p167 = por %p165, %p166
      %p168 = scmp.ne.s32.totalorder %s160, %s163
      %p169 = scmp.eq.s32.totalorder %s19, 0
      %p170 = por %p168, %p169
      %p171 = scmp.ne.s32.totalorder %s160, %s163
      %p172 = scmp.eq.s32.totalorder %s24, 1
      %p173 = por %p171, %p172
      %p174 = scmp.ne.s32.totalorder %s163, %s164
      %p175 = scmp.eq.s32.totalorder %s24, 0
      %p176 = por %p174, %p175
      %p177 = scmp.ne.s32.totalorder %s163, %s164
      %p178 = scmp.eq.s32.totalorder %s25, 1
      %p179 = por %p177, %p178
      %p181 = scmp.ne.s32.totalorder %s164, %s180
      %p182 = scmp.eq.s32.totalorder %s25, 0
      %p183 = por %p181, %p182
      %p184 = scmp.le.s32.totalorder 1, %s19
      %p185 = scmp.lt.s32.totalorder %s19, 3
      %p186 = pnand %p184, %p185
      %p187 = pneg %p186
      // Predicated region
      $region9: #{tpu_custom_call.1} parent=5 // pred_check
        _
      $region10: #{tpu_custom_call.1} parent=5 // pred_check_branch
        %189 = sbr.rel (%p186) target = $region12
      $region11: #{tpu_custom_call.1} parent=5 // pred_region
        %s190 = ssub.s32 %s19, 1
        // Predicated region
        $region13: #{tpu_custom_call.1} parent=11 // pred_check
          %p191 = pneg %p66
        $region14: #{tpu_custom_call.1} parent=11 // pred_check_branch
          %193 = sbr.rel (%p191) target = $region16
        $region15: #{tpu_custom_call.1} parent=11 // pred_region
          _
        $region16: #{tpu_custom_call.1} parent=11 // pred_fallthru
          _
        // Predicated region
        $region17: #{tpu_custom_call.1} parent=11 // pred_check
          %p194 = pneg %p87
        $region18: #{tpu_custom_call.1} parent=11 // pred_check_branch
          %196 = sbr.rel (%p194) target = $region20
        $region19: #{tpu_custom_call.1} parent=11 // pred_region
          _
        $region20: #{tpu_custom_call.1} parent=11 // pred_fallthru
          _
        // Predicated region
        $region21: #{tpu_custom_call.1} parent=11 // pred_check
          %p197 = pneg %p108
        $region22: #{tpu_custom_call.1} parent=11 // pred_check_branch
          %199 = sbr.rel (%p197) target = $region24
        $region23: #{tpu_custom_call.1} parent=11 // pred_region
          %s201 = ssub.s32 1024, 1024
          %202 = vsyncadd [#allocation6], %s201
          %s203 = sshll.u32 [#allocation5], 4
          %s204 = int_to_ptr.vmem [resolvable:$true] %s203
          %209 = dma.hbm_to_vmem [thread:$0]  %s3, 1024, %s204, [#allocation6], 256, 256, 16
        $region24: #{tpu_custom_call.1} parent=11 // pred_fallthru
          _
        // Predicated region
        $region25: #{tpu_custom_call.1} parent=11 // pred_check
          %p210 = pneg %p129
        $region26: #{tpu_custom_call.1} parent=11 // pred_check_branch
          %212 = sbr.rel (%p210) target = $region28
        $region27: #{tpu_custom_call.1} parent=11 // pred_region
          _
        $region28: #{tpu_custom_call.1} parent=11 // pred_fallthru
          _
        // Predicated region
        $region29: #{tpu_custom_call.1} parent=11 // pred_check
          %p213 = pneg %p150
        $region30: #{tpu_custom_call.1} parent=11 // pred_check_branch
          %215 = sbr.rel (%p213) target = $region32
        $region31: #{tpu_custom_call.1} parent=11 // pred_region
          _
        $region32: #{tpu_custom_call.1} parent=11 // pred_fallthru
          _
      $region12: #{tpu_custom_call.1} parent=5 // pred_fallthru
        _
      %p216 = scmp.lt.s32.totalorder %s19, 2
      // Predicated region
      $region33: #{tpu_custom_call.1} parent=5 // pred_check
        %p217 = pneg %p216
      $region34: #{tpu_custom_call.1} parent=5 // pred_check_branch
        %219 = sbr.rel (%p217) target = $region36
      $region35: #{tpu_custom_call.1} parent=5 // pred_region
        // Predicated region
        $region37: #{tpu_custom_call.1} parent=35 // pred_check
          %p220 = pneg %p39
        $region38: #{tpu_custom_call.1} parent=35 // pred_check_branch
          %222 = sbr.rel (%p220) target = $region40
        $region39: #{tpu_custom_call.1} parent=35 // pred_region
          %s223 = sand.u32 %s29, 1
          %s224 = scalar_lea.sflag [#allocation3], %s223
          %s225 = sand.u32 %s29, 1
          %s226 = smul.addr %s225, 96
          %s227 = scalar_lea.vmem [#allocation2], %s226
          %s229 = ssub.s32 1536, 1536
          %230 = vsyncadd %s224, %s229
          %s231 = smul.addr %s19, 12
          %s232 = smul.addr %s231, 128
          %s233 = scalar_lea.hbm %s0, %s232
          %s234 = sshll.u32 %s227, 4
          %s235 = int_to_ptr.vmem [resolvable:$true] %s234
          %240 = dma.hbm_to_vmem [thread:$0]  %s233, 1536, %s235, %s224, 384, 384, 24
        $region40: #{tpu_custom_call.1} parent=35 // pred_fallthru
          _
      $region36: #{tpu_custom_call.1} parent=5 // pred_fallthru
        _
      %p241 = scmp.le.s32.totalorder 1, %s19
      %p242 = scmp.lt.s32.totalorder %s19, 3
      %p243 = pnand %p241, %p242
      %p244 = pneg %p243
      // Predicated region
      $region41: #{tpu_custom_call.1} parent=5 // pred_check
        _
      $region42: #{tpu_custom_call.1} parent=5 // pred_check_branch
        %246 = sbr.rel (%p243) target = $region44
      $region43: #{tpu_custom_call.1} parent=5 // pred_region
        %s247 = ssub.s32 %s19, 1
        %s248 = sand.u32 %s32, 1
        %s249 = scalar_lea.sflag [#allocation3], %s248
        %s250 = sand.u32 %s32, 1
        %s251 = smul.addr %s250, 96
        %s252 = scalar_lea.vmem [#allocation2], %s251
        // Predicated region
        $region45: #{tpu_custom_call.1} parent=43 // pred_check
          %p253 = pneg %p45
        $region46: #{tpu_custom_call.1} parent=43 // pred_check_branch
          %255 = sbr.rel (%p253) target = $region48
        $region47: #{tpu_custom_call.1} parent=43 // pred_region
          %256 = dma.done %s249, 1536
        $region48: #{tpu_custom_call.1} parent=43 // pred_fallthru
          _
        // Predicated region
        $region49: #{tpu_custom_call.1} parent=43 // pred_check
          %p257 = pneg %p108
        $region50: #{tpu_custom_call.1} parent=43 // pred_check_branch
          %259 = sbr.rel (%p257) target = $region52
        $region51: #{tpu_custom_call.1} parent=43 // pred_region
          %260 = dma.done [#allocation6], 1024
        $region52: #{tpu_custom_call.1} parent=43 // pred_fallthru
          _
        %s261 = sand.u32 %s32, 1
        %s262 = scalar_lea.sflag [#allocation3], %s261
        %s263 = sand.u32 %s32, 1
        %s264 = smul.addr %s263, 96
        %s265 = scalar_lea.vmem [#allocation2], %s264
        %p266 = pneg %p45
        %p267 = pneg %p42
        %p268 = pneg %p66
        %p269 = pneg %p63
        %p270 = pneg %p87
        %p271 = pneg %p84
        %p272 = pneg %p108
        %p273 = pneg %p105
        %p274 = pneg %p129
        %p275 = pneg %p126
        %p276 = pneg %p150
        %p277 = pneg %p147
        %p278 = pneg %p176
        %p279 = pneg %p173
        %s280 = sand.u32 %s163, 1
        %s281 = scalar_lea.sflag [#allocation4], %s280
        %s282 = sand.u32 %s163, 1
        %s283 = smul.addr %s282, 96
        %s284 = scalar_lea.vmem [#allocation7], %s283
        %v285 = vld [vmem:[%s252] sm:$0xff]
        %v286 = vld [vmem:[%s252 + $0x8] sm:$0xff]
        %v287 = vld [vmem:[%s252 + $0x10] sm:$0xff]
        %v288 = vld [vmem:[%s252 + $0x18] sm:$0xff]
        %v289 = vld [vmem:[%s252 + $0x20] sm:$0xff]
        %v290 = vld [vmem:[%s252 + $0x28] sm:$0xff]
        %v291 = vld [vmem:[%s252 + $0x30] sm:$0xff]
        %v292 = vld [vmem:[%s252 + $0x38] sm:$0xff]
        %v293 = vld [vmem:[%s252 + $0x40] sm:$0xff]
        %v294 = vld [vmem:[%s252 + $0x48] sm:$0xff]
        %v295 = vld [vmem:[%s252 + $0x50] sm:$0xff]
        %v296 = vld [vmem:[%s252 + $0x58] sm:$0xff]
        %297 = vrot.lane.b32.xlu0 %v285, 19
        %v298 = vpop.permute.xlu0 %297
        %299 = vrot.lane.b32.xlu0 %v288, 19
        %v300 = vpop.permute.xlu0 %299
        %301 = vrot.lane.b32.xlu0 %v291, 19
        %v302 = vpop.permute.xlu0 %301
        %303 = vrot.lane.b32.xlu0 %v294, 19
        %v304 = vpop.permute.xlu0 %303
        %305 = vrot.lane.b32.xlu0 %v286, 19
        %v306 = vpop.permute.xlu0 %305
        %307 = vrot.lane.b32.xlu0 %v289, 19
        %v308 = vpop.permute.xlu0 %307
        %309 = vrot.lane.b32.xlu0 %v292, 19
        %v310 = vpop.permute.xlu0 %309
        %311 = vrot.lane.b32.xlu0 %v295, 19
        %v312 = vpop.permute.xlu0 %311
        %313 = vrot.lane.b32.xlu0 %v287, 19
        %v314 = vpop.permute.xlu0 %313
        %315 = vrot.lane.b32.xlu0 %v290, 19
        %v316 = vpop.permute.xlu0 %315
        %317 = vrot.lane.b32.xlu0 %v293, 19
        %v318 = vpop.permute.xlu0 %317
        %319 = vrot.lane.b32.xlu0 %v296, 19
        %v320 = vpop.permute.xlu0 %319
        %v321 = vlaneseq
        %v322 = vand.u32 %v321, 127
        %vm323 = vcmp.lt.s32.totalorder %v322, 19
        %v324 = vsel %vm323, %v306, %v314
        %v325 = vsel %vm323, %v308, %v316
        %v326 = vsel %vm323, %v310, %v318
        %v327 = vsel %vm323, %v312, %v320
        %v328 = vsel %vm323, %v298, %v306
        %v329 = vsel %vm323, %v300, %v308
        %v330 = vsel %vm323, %v302, %v310
        %v331 = vsel %vm323, %v304, %v312
        %v332 = vsel %vm323, %v314, %v298
        %v333 = vsel %vm323, %v316, %v300
        %v334 = vsel %vm323, %v318, %v302
        %v335 = vsel %vm323, %v320, %v304
        %336 = vrot.lane.b32.xlu0 %v285, 18
        %v337 = vpop.permute.xlu0 %336
        %338 = vrot.lane.b32.xlu0 %v288, 18
        %v339 = vpop.permute.xlu0 %338
        %340 = vrot.lane.b32.xlu0 %v291, 18
        %v341 = vpop.permute.xlu0 %340
        %342 = vrot.lane.b32.xlu0 %v294, 18
        %v343 = vpop.permute.xlu0 %342
        %344 = vrot.lane.b32.xlu0 %v286, 18
        %v345 = vpop.permute.xlu0 %344
        %346 = vrot.lane.b32.xlu0 %v289, 18
        %v347 = vpop.permute.xlu0 %346
        %348 = vrot.lane.b32.xlu0 %v292, 18
        %v349 = vpop.permute.xlu0 %348
        %350 = vrot.lane.b32.xlu0 %v295, 18
        %v351 = vpop.permute.xlu0 %350
        %352 = vrot.lane.b32.xlu0 %v287, 18
        %v353 = vpop.permute.xlu0 %352
        %354 = vrot.lane.b32.xlu0 %v290, 18
        %v355 = vpop.permute.xlu0 %354
        %356 = vrot.lane.b32.xlu0 %v293, 18
        %v357 = vpop.permute.xlu0 %356
        %358 = vrot.lane.b32.xlu0 %v296, 18
        %v359 = vpop.permute.xlu0 %358
        %vm360 = vcmp.lt.s32.totalorder %v322, 18
        %v361 = vsel %vm360, %v345, %v353
        %v362 = vsel %vm360, %v347, %v355
        %v363 = vsel %vm360, %v349, %v357
        %v364 = vsel %vm360, %v351, %v359
        %v365 = vsel %vm360, %v337, %v345
        %v366 = vsel %vm360, %v339, %v347
        %v367 = vsel %vm360, %v341, %v349
        %v368 = vsel %vm360, %v343, %v351
        %v369 = vsel %vm360, %v353, %v337
        %v370 = vsel %vm360, %v355, %v339
        %v371 = vsel %vm360, %v357, %v341
        %v372 = vsel %vm360, %v359, %v343
        %373 = vrot.lane.b32.xlu0 %v285, 17
        %v374 = vpop.permute.xlu0 %373
        %375 = vrot.lane.b32.xlu0 %v288, 17
        %v376 = vpop.permute.xlu0 %375
        %377 = vrot.lane.b32.xlu0 %v291, 17
        %v378 = vpop.permute.xlu0 %377
        %379 = vrot.lane.b32.xlu0 %v294, 17
        %v380 = vpop.permute.xlu0 %379
        %381 = vrot.lane.b32.xlu0 %v286, 17
        %v382 = vpop.permute.xlu0 %381
        %383 = vrot.lane.b32.xlu0 %v289, 17
        %v384 = vpop.permute.xlu0 %383
        %385 = vrot.lane.b32.xlu0 %v292, 17
        %v386 = vpop.permute.xlu0 %385
        %387 = vrot.lane.b32.xlu0 %v295, 17
        %v388 = vpop.permute.xlu0 %387
        %389 = vrot.lane.b32.xlu0 %v287, 17
        %v390 = vpop.permute.xlu0 %389
        %391 = vrot.lane.b32.xlu0 %v290, 17
        %v392 = vpop.permute.xlu0 %391
        %393 = vrot.lane.b32.xlu0 %v293, 17
        %v394 = vpop.permute.xlu0 %393
        %395 = vrot.lane.b32.xlu0 %v296, 17
        %v396 = vpop.permute.xlu0 %395
        %vm397 = vcmp.lt.s32.totalorder %v322, 17
        %v398 = vsel %vm397, %v382, %v390
        %v399 = vsel %vm397, %v384, %v392
        %v400 = vsel %vm397, %v386, %v394
        %v401 = vsel %vm397, %v388, %v396
        %v402 = vsel %vm397, %v374, %v382
        %v403 = vsel %vm397, %v376, %v384
        %v404 = vsel %vm397, %v378, %v386
        %v405 = vsel %vm397, %v380, %v388
        %v406 = vsel %vm397, %v390, %v374
        %v407 = vsel %vm397, %v392, %v376
        %v408 = vsel %vm397, %v394, %v378
        %v409 = vsel %vm397, %v396, %v380
        %410 = vrot.lane.b32.xlu0 %v285, 1
        %v411 = vpop.permute.xlu0 %410
        %412 = vrot.lane.b32.xlu0 %v288, 1
        %v413 = vpop.permute.xlu0 %412
        %414 = vrot.lane.b32.xlu0 %v291, 1
        %v415 = vpop.permute.xlu0 %414
        %416 = vrot.lane.b32.xlu0 %v294, 1
        %v417 = vpop.permute.xlu0 %416
        %418 = vrot.lane.b32.xlu0 %v286, 1
        %v419 = vpop.permute.xlu0 %418
        %420 = vrot.lane.b32.xlu0 %v289, 1
        %v421 = vpop.permute.xlu0 %420
        %422 = vrot.lane.b32.xlu0 %v292, 1
        %v423 = vpop.permute.xlu0 %422
        %424 = vrot.lane.b32.xlu0 %v295, 1
        %v425 = vpop.permute.xlu0 %424
        %426 = vrot.lane.b32.xlu0 %v287, 1
        %v427 = vpop.permute.xlu0 %426
        %428 = vrot.lane.b32.xlu0 %v290, 1
        %v429 = vpop.permute.xlu0 %428
        %430 = vrot.lane.b32.xlu0 %v293, 1
        %v431 = vpop.permute.xlu0 %430
        %432 = vrot.lane.b32.xlu0 %v296, 1
        %v433 = vpop.permute.xlu0 %432
        %vm434 = vcmp.lt.s32.totalorder %v322, 1
        %v435 = vsel %vm434, %v419, %v427
        %v436 = vsel %vm434, %v421, %v429
        %v437 = vsel %vm434, %v423, %v431
        %v438 = vsel %vm434, %v425, %v433
        %v439 = vsel %vm434, %v411, %v419
        %v440 = vsel %vm434, %v413, %v421
        %v441 = vsel %vm434, %v415, %v423
        %v442 = vsel %vm434, %v417, %v425
        %v443 = vsel %vm434, %v427, %v411
        %v444 = vsel %vm434, %v429, %v413
        %v445 = vsel %vm434, %v431, %v415
        %v446 = vsel %vm434, %v433, %v417
        %447 = vrot.lane.b32.xlu0 %v285, 127
        %v448 = vpop.permute.xlu0 %447
        %449 = vrot.lane.b32.xlu0 %v288, 127
        %v450 = vpop.permute.xlu0 %449
        %451 = vrot.lane.b32.xlu0 %v291, 127
        %v452 = vpop.permute.xlu0 %451
        %453 = vrot.lane.b32.xlu0 %v294, 127
        %v454 = vpop.permute.xlu0 %453
        %455 = vrot.lane.b32.xlu0 %v286, 127
        %v456 = vpop.permute.xlu0 %455
        %457 = vrot.lane.b32.xlu0 %v289, 127
        %v458 = vpop.permute.xlu0 %457
        %459 = vrot.lane.b32.xlu0 %v292, 127
        %v460 = vpop.permute.xlu0 %459
        %461 = vrot.lane.b32.xlu0 %v295, 127
        %v462 = vpop.permute.xlu0 %461
        %463 = vrot.lane.b32.xlu0 %v287, 127
        %v464 = vpop.permute.xlu0 %463
        %465 = vrot.lane.b32.xlu0 %v290, 127
        %v466 = vpop.permute.xlu0 %465
        %467 = vrot.lane.b32.xlu0 %v293, 127
        %v468 = vpop.permute.xlu0 %467
        %469 = vrot.lane.b32.xlu0 %v296, 127
        %v470 = vpop.permute.xlu0 %469
        %vm471 = vcmp.lt.s32.totalorder %v322, 127
        %v472 = vsel %vm471, %v456, %v464
        %v473 = vsel %vm471, %v458, %v466
        %v474 = vsel %vm471, %v460, %v468
        %v475 = vsel %vm471, %v462, %v470
        %v476 = vsel %vm471, %v448, %v456
        %v477 = vsel %vm471, %v450, %v458
        %v478 = vsel %vm471, %v452, %v460
        %v479 = vsel %vm471, %v454, %v462
        %v480 = vsel %vm471, %v464, %v448
        %v481 = vsel %vm471, %v466, %v450
        %v482 = vsel %vm471, %v468, %v452
        %v483 = vsel %vm471, %v470, %v454
        %484 = vrot.lane.b32.xlu0 %v285, 111
        %v485 = vpop.permute.xlu0 %484
        %486 = vrot.lane.b32.xlu0 %v288, 111
        %v487 = vpop.permute.xlu0 %486
        %488 = vrot.lane.b32.xlu0 %v291, 111
        %v489 = vpop.permute.xlu0 %488
        %490 = vrot.lane.b32.xlu0 %v294, 111
        %v491 = vpop.permute.xlu0 %490
        %492 = vrot.lane.b32.xlu0 %v286, 111
        %v493 = vpop.permute.xlu0 %492
        %494 = vrot.lane.b32.xlu0 %v289, 111
        %v495 = vpop.permute.xlu0 %494
        %496 = vrot.lane.b32.xlu0 %v292, 111
        %v497 = vpop.permute.xlu0 %496
        %498 = vrot.lane.b32.xlu0 %v295, 111
        %v499 = vpop.permute.xlu0 %498
        %500 = vrot.lane.b32.xlu0 %v287, 111
        %v501 = vpop.permute.xlu0 %500
        %502 = vrot.lane.b32.xlu0 %v290, 111
        %v503 = vpop.permute.xlu0 %502
        %504 = vrot.lane.b32.xlu0 %v293, 111
        %v505 = vpop.permute.xlu0 %504
        %506 = vrot.lane.b32.xlu0 %v296, 111
        %v507 = vpop.permute.xlu0 %506
        %vm508 = vcmp.lt.s32.totalorder %v322, 111
        %v509 = vsel %vm508, %v493, %v501
        %v510 = vsel %vm508, %v495, %v503
        %v511 = vsel %vm508, %v497, %v505
        %v512 = vsel %vm508, %v499, %v507
        %v513 = vsel %vm508, %v485, %v493
        %v514 = vsel %vm508, %v487, %v495
        %v515 = vsel %vm508, %v489, %v497
        %v516 = vsel %vm508, %v491, %v499
        %v517 = vsel %vm508, %v501, %v485
        %v518 = vsel %vm508, %v503, %v487
        %v519 = vsel %vm508, %v505, %v489
        %v520 = vsel %vm508, %v507, %v491
        %521 = vrot.lane.b32.xlu0 %v285, 110
        %v522 = vpop.permute.xlu0 %521
        %523 = vrot.lane.b32.xlu0 %v288, 110
        %v524 = vpop.permute.xlu0 %523
        %525 = vrot.lane.b32.xlu0 %v291, 110
        %v526 = vpop.permute.xlu0 %525
        %527 = vrot.lane.b32.xlu0 %v294, 110
        %v528 = vpop.permute.xlu0 %527
        %529 = vrot.lane.b32.xlu0 %v286, 110
        %v530 = vpop.permute.xlu0 %529
        %531 = vrot.lane.b32.xlu0 %v289, 110
        %v532 = vpop.permute.xlu0 %531
        %533 = vrot.lane.b32.xlu0 %v292, 110
        %v534 = vpop.permute.xlu0 %533
        %535 = vrot.lane.b32.xlu0 %v295, 110
        %v536 = vpop.permute.xlu0 %535
        %537 = vrot.lane.b32.xlu0 %v287, 110
        %v538 = vpop.permute.xlu0 %537
        %539 = vrot.lane.b32.xlu0 %v290, 110
        %v540 = vpop.permute.xlu0 %539
        %541 = vrot.lane.b32.xlu0 %v293, 110
        %v542 = vpop.permute.xlu0 %541
        %543 = vrot.lane.b32.xlu0 %v296, 110
        %v544 = vpop.permute.xlu0 %543
        %vm545 = vcmp.lt.s32.totalorder %v322, 110
        %v546 = vsel %vm545, %v530, %v538
        %v547 = vsel %vm545, %v532, %v540
        %v548 = vsel %vm545, %v534, %v542
        %v549 = vsel %vm545, %v536, %v544
        %v550 = vsel %vm545, %v522, %v530
        %v551 = vsel %vm545, %v524, %v532
        %v552 = vsel %vm545, %v526, %v534
        %v553 = vsel %vm545, %v528, %v536
        %v554 = vsel %vm545, %v538, %v522
        %v555 = vsel %vm545, %v540, %v524
        %v556 = vsel %vm545, %v542, %v526
        %v557 = vsel %vm545, %v544, %v528
        %558 = vrot.lane.b32.xlu0 %v285, 109
        %v559 = vpop.permute.xlu0 %558
        %560 = vrot.lane.b32.xlu0 %v288, 109
        %v561 = vpop.permute.xlu0 %560
        %562 = vrot.lane.b32.xlu0 %v291, 109
        %v563 = vpop.permute.xlu0 %562
        %564 = vrot.lane.b32.xlu0 %v294, 109
        %v565 = vpop.permute.xlu0 %564
        %566 = vrot.lane.b32.xlu0 %v286, 109
        %v567 = vpop.permute.xlu0 %566
        %568 = vrot.lane.b32.xlu0 %v289, 109
        %v569 = vpop.permute.xlu0 %568
        %570 = vrot.lane.b32.xlu0 %v292, 109
        %v571 = vpop.permute.xlu0 %570
        %572 = vrot.lane.b32.xlu0 %v295, 109
        %v573 = vpop.permute.xlu0 %572
        %574 = vrot.lane.b32.xlu0 %v287, 109
        %v575 = vpop.permute.xlu0 %574
        %576 = vrot.lane.b32.xlu0 %v290, 109
        %v577 = vpop.permute.xlu0 %576
        %578 = vrot.lane.b32.xlu0 %v293, 109
        %v579 = vpop.permute.xlu0 %578
        %580 = vrot.lane.b32.xlu0 %v296, 109
        %v581 = vpop.permute.xlu0 %580
        %vm582 = vcmp.lt.s32.totalorder %v322, 109
        %v583 = vsel %vm582, %v567, %v575
        %v584 = vsel %vm582, %v569, %v577
        %v585 = vsel %vm582, %v571, %v579
        %v586 = vsel %vm582, %v573, %v581
        %v587 = vsel %vm582, %v559, %v567
        %v588 = vsel %vm582, %v561, %v569
        %v589 = vsel %vm582, %v563, %v571
        %v590 = vsel %vm582, %v565, %v573
        %v591 = vsel %vm582, %v575, %v559
        %v592 = vsel %vm582, %v577, %v561
        %v593 = vsel %vm582, %v579, %v563
        %v594 = vsel %vm582, %v581, %v565
        %v595 = vld [vmem:[%s1] sm:$0xff]
        %v596 = vld [vmem:[%s1 + $0x8] sm:$0xff]
        %v597 = vld [vmem:[%s1 + $0x10] sm:$0xff]
        %v598 = vld [vmem:[%s1 + $0x18] sm:$0xff]
        %v599 = vld [vmem:[%s1 + $0x20] sm:$0xff]
        %v600 = vld [vmem:[%s1 + $0x28] sm:$0xff]
        %v601 = vld [vmem:[%s2] sm:$0xff]
        %v602 = vld [vmem:[%s2 + $0x8] sm:$0xff]
        %604 = vset.pattern.permute.xlu0 0
        %605 = vperm.xlu0 %604, %v601
        %v606 = vpop.permute.xlu0 %605
        %609 = vset.pattern.permute.xlu0 0
        %610 = vperm.xlu0 %609, %v602
        %v611 = vpop.permute.xlu0 %610
        %vm613 = vcmask 261120
        %v615 = vsel %vm613, %v597, 0
        %v618 = vsel %vm613, %v600, 0
        %620 = vmatprep.subr.mxu0 %v442
        %621 = vmatpush1.msra.mxu0 %v446
        %622 = vmatprep.subr.mxu0 %v441
        %623 = vmatpush1.msra.mxu0 %v445
        %624 = vmatprep.subr.mxu0 %v440
        %625 = vmatpush1.msra.mxu0 %v444
        %626 = vmatprep.subr.mxu0 %v439
        %627 = vmatpush1.msra.mxu0 %v443
        %628 = vmatprep.subr.mxu0 %v405
        %629 = vmatpush1.msra.mxu0 %v409
        %630 = vmatprep.subr.mxu0 %v404
        %631 = vmatpush1.msra.mxu0 %v408
        %632 = vmatprep.subr.mxu0 %v403
        %633 = vmatpush1.msra.mxu0 %v407
        %634 = vmatprep.subr.mxu0 %v402
        %635 = vmatpush1.msra.mxu0 %v406
        %636 = vmatprep.subr.mxu0 %v368
        %637 = vmatpush1.msra.mxu0 %v372
        %638 = vmatprep.subr.mxu0 %v367
        %639 = vmatpush1.msra.mxu0 %v371
        %640 = vmatprep.subr.mxu0 %v366
        %641 = vmatpush1.msra.mxu0 %v370
        %642 = vmatprep.subr.mxu0 %v365
        %643 = vmatpush1.msra.mxu0 %v369
        %644 = vmatprep.subr.mxu0 %v331
        %645 = vmatpush1.msra.mxu0 %v335
        %646 = vmatprep.subr.mxu0 %v330
        %647 = vmatpush1.msra.mxu0 %v334
        %648 = vmatprep.subr.mxu0 %v329
        %649 = vmatpush1.msra.mxu0 %v333
        %650 = vmatprep.subr.mxu0 %v328
        %651 = vmatpush1.msra.mxu0 %v332
        %652 = vmatprep.subr.mxu0 %v549
        %653 = vmatpush2.msra.mxu0 %v553
        %654 = vmatprep.subr.mxu0 %v548
        %655 = vmatpush2.msra.mxu0 %v552
        %656 = vmatprep.subr.mxu0 %v547
        %657 = vmatpush2.msra.mxu0 %v551
        %658 = vmatprep.subr.mxu0 %v546
        %659 = vmatpush2.msra.mxu0 %v550
        %660 = vmatprep.subr.mxu0 %v512
        %661 = vmatpush2.msra.mxu0 %v516
        %662 = vmatprep.subr.mxu0 %v511
        %663 = vmatpush2.msra.mxu0 %v515
        %664 = vmatprep.subr.mxu0 %v510
        %665 = vmatpush2.msra.mxu0 %v514
        %666 = vmatprep.subr.mxu0 %v509
        %667 = vmatpush2.msra.mxu0 %v513
        %668 = vmatprep.subr.mxu0 %v475
        %669 = vmatpush2.msra.mxu0 %v479
        %670 = vmatprep.subr.mxu0 %v474
        %671 = vmatpush2.msra.mxu0 %v478
        %672 = vmatprep.subr.mxu0 %v473
        %673 = vmatpush2.msra.mxu0 %v477
        %674 = vmatprep.subr.mxu0 %v472
        %675 = vmatpush2.msra.mxu0 %v476
        %676 = vmatprep.subr.mxu0 %v295
        %677 = vmatpush2.msra.mxu0 %v294
        %678 = vmatprep.subr.mxu0 %v292
        %679 = vmatpush2.msra.mxu0 %v291
        %680 = vmatprep.subr.mxu0 %v289
        %681 = vmatpush2.msra.mxu0 %v288
        %682 = vmatprep.subr.mxu0 %v286
        %683 = vmatpush2.msra.mxu0 %v285
        %684 = vmatprep.mubr.f32.mxu0 %v596
        %685 = vmatmul.mubr.f32.gmra.mxu0 %v595
        %v686 = vpop.f32.mrf.mxu0
        %v687 = vadd.f32 %v606, %v686
        %v688 = vpop.f32.mrf.mxu0
        %v689 = vadd.f32 %v606, %v688
        %690 = vmatprep.mubr.f32.mxu0 %v599
        %691 = vmatmul.mubr.f32.gmra.mxu0 %v598
        %v692 = vpop.f32.mrf.mxu0
        %v693 = vadd.f32 %v611, %v692
        %v694 = vpop.f32.mrf.mxu0
        %v695 = vadd.f32 %v611, %v694
        %696 = vdwg.mxu0
        %697 = vmatprep.subr.mxu0 0.0
        %698 = vmatpush1.msra.mxu0 0.0
        %699 = vmatprep.subr.mxu0 0.0
        %700 = vmatpush1.msra.mxu0 0.0
        %701 = vmatprep.subr.mxu0 0.0
        %702 = vmatpush1.msra.mxu0 0.0
        %703 = vmatprep.subr.mxu0 0.0
        %704 = vmatpush1.msra.mxu0 0.0
        %705 = vmatprep.subr.mxu0 0.0
        %706 = vmatpush1.msra.mxu0 0.0
        %707 = vmatprep.subr.mxu0 0.0
        %708 = vmatpush1.msra.mxu0 0.0
        %709 = vmatprep.subr.mxu0 0.0
        %710 = vmatpush1.msra.mxu0 0.0
        %711 = vmatprep.subr.mxu0 0.0
        %712 = vmatpush1.msra.mxu0 0.0
        %713 = vmatprep.subr.mxu0 0.0
        %714 = vmatpush1.msra.mxu0 0.0
        %715 = vmatprep.subr.mxu0 0.0
        %716 = vmatpush1.msra.mxu0 0.0
        %717 = vmatprep.subr.mxu0 0.0
        %718 = vmatpush1.msra.mxu0 0.0
        %719 = vmatprep.subr.mxu0 0.0
        %720 = vmatpush1.msra.mxu0 0.0
        %721 = vmatprep.subr.mxu0 %v586
        %722 = vmatpush1.msra.mxu0 %v590
        %723 = vmatprep.subr.mxu0 %v585
        %724 = vmatpush1.msra.mxu0 %v589
        %725 = vmatprep.subr.mxu0 %v584
        %726 = vmatpush1.msra.mxu0 %v588
        %727 = vmatprep.subr.mxu0 %v583
        %728 = vmatpush1.msra.mxu0 %v587
        %729 = vmatprep.subr.mxu0 0.0
        %730 = vmatpush2.msra.mxu0 0.0
        %731 = vmatprep.subr.mxu0 0.0
        %732 = vmatpush2.msra.mxu0 0.0
        %733 = vmatprep.subr.mxu0 0.0
        %734 = vmatpush2.msra.mxu0 0.0
        %735 = vmatprep.subr.mxu0 0.0
        %736 = vmatpush2.msra.mxu0 0.0
        %737 = vmatprep.subr.mxu0 0.0
        %738 = vmatpush2.msra.mxu0 0.0
        %739 = vmatprep.subr.mxu0 0.0
        %740 = vmatpush2.msra.mxu0 0.0
        %741 = vmatprep.subr.mxu0 0.0
        %742 = vmatpush2.msra.mxu0 0.0
        %743 = vmatprep.subr.mxu0 0.0
        %744 = vmatpush2.msra.mxu0 0.0
        %745 = vmatprep.subr.mxu0 0.0
        %746 = vmatpush2.msra.mxu0 0.0
        %747 = vmatprep.subr.mxu0 0.0
        %748 = vmatpush2.msra.mxu0 0.0
        %749 = vmatprep.subr.mxu0 0.0
        %750 = vmatpush2.msra.mxu0 0.0
        %751 = vmatprep.subr.mxu0 0.0
        %752 = vmatpush2.msra.mxu0 0.0
        %753 = vmatprep.subr.mxu0 0.0
        %754 = vmatpush2.msra.mxu0 0.0
        %755 = vmatprep.subr.mxu0 0.0
        %756 = vmatpush2.msra.mxu0 0.0
        %757 = vmatprep.subr.mxu0 0.0
        %758 = vmatpush2.msra.mxu0 0.0
        %759 = vmatprep.subr.mxu0 0.0
        %760 = vmatpush2.msra.mxu0 0.0
        %761 = vmatprep.mubr.f32.mxu0 0.0
        %762 = vmatmul.mubr.f32.gmra.mxu0 %v615
        %v763 = vpop.f32.mrf.mxu0
        %v764 = vadd.f32 %v687, %v763
        %v765 = vpop.f32.mrf.mxu0
        %v766 = vadd.f32 %v689, %v765
        %767 = vmatprep.mubr.f32.mxu0 0.0
        %768 = vmatmul.mubr.f32.gmra.mxu0 %v618
        %v769 = vpop.f32.mrf.mxu0
        %v770 = vadd.f32 %v693, %v769
        %v771 = vpop.f32.mrf.mxu0
        %v772 = vadd.f32 %v695, %v771
        %773 = vdwg.mxu0
        %774 = vmatprep.subr.mxu0 0.0
        %775 = vmatpush1.msra.mxu0 %v438
        %776 = vmatprep.subr.mxu0 0.0
        %777 = vmatpush1.msra.mxu0 %v437
        %778 = vmatprep.subr.mxu0 0.0
        %779 = vmatpush1.msra.mxu0 %v436
        %780 = vmatprep.subr.mxu0 0.0
        %781 = vmatpush1.msra.mxu0 %v435
        %782 = vmatprep.subr.mxu0 0.0
        %783 = vmatpush1.msra.mxu0 %v401
        %784 = vmatprep.subr.mxu0 0.0
        %785 = vmatpush1.msra.mxu0 %v400
        %786 = vmatprep.subr.mxu0 0.0
        %787 = vmatpush1.msra.mxu0 %v399
        %788 = vmatprep.subr.mxu0 0.0
        %789 = vmatpush1.msra.mxu0 %v398
        %790 = vmatprep.subr.mxu0 0.0
        %791 = vmatpush1.msra.mxu0 %v364
        %792 = vmatprep.subr.mxu0 0.0
        %793 = vmatpush1.msra.mxu0 %v363
        %794 = vmatprep.subr.mxu0 0.0
        %795 = vmatpush1.msra.mxu0 %v362
        %796 = vmatprep.subr.mxu0 0.0
        %797 = vmatpush1.msra.mxu0 %v361
        %798 = vmatprep.subr.mxu0 0.0
        %799 = vmatpush1.msra.mxu0 %v327
        %800 = vmatprep.subr.mxu0 0.0
        %801 = vmatpush1.msra.mxu0 %v326
        %802 = vmatprep.subr.mxu0 0.0
        %803 = vmatpush1.msra.mxu0 %v325
        %804 = vmatprep.subr.mxu0 0.0
        %805 = vmatpush1.msra.mxu0 %v324
        %806 = vmatprep.subr.mxu0 0.0
        %807 = vmatpush2.msra.mxu0 %v557
        %808 = vmatprep.subr.mxu0 0.0
        %809 = vmatpush2.msra.mxu0 %v556
        %810 = vmatprep.subr.mxu0 0.0
        %811 = vmatpush2.msra.mxu0 %v555
        %812 = vmatprep.subr.mxu0 0.0
        %813 = vmatpush2.msra.mxu0 %v554
        %814 = vmatprep.subr.mxu0 0.0
        %815 = vmatpush2.msra.mxu0 %v520
        %816 = vmatprep.subr.mxu0 0.0
        %817 = vmatpush2.msra.mxu0 %v519
        %818 = vmatprep.subr.mxu0 0.0
        %819 = vmatpush2.msra.mxu0 %v518
        %820 = vmatprep.subr.mxu0 0.0
        %821 = vmatpush2.msra.mxu0 %v517
        %822 = vmatprep.subr.mxu0 0.0
        %823 = vmatpush2.msra.mxu0 %v483
        %824 = vmatprep.subr.mxu0 0.0
        %825 = vmatpush2.msra.mxu0 %v482
        %826 = vmatprep.subr.mxu0 0.0
        %827 = vmatpush2.msra.mxu0 %v481
        %828 = vmatprep.subr.mxu0 0.0
        %829 = vmatpush2.msra.mxu0 %v480
        %830 = vmatprep.subr.mxu0 0.0
        %831 = vmatpush2.msra.mxu0 %v296
        %832 = vmatprep.subr.mxu0 0.0
        %833 = vmatpush2.msra.mxu0 %v293
        %834 = vmatprep.subr.mxu0 0.0
        %835 = vmatpush2.msra.mxu0 %v290
        %836 = vmatprep.subr.mxu0 0.0
        %837 = vmatpush2.msra.mxu0 %v287
        %838 = vmatprep.mubr.f32.mxu0 %v596
        %839 = vmatmul.mubr.f32.gmra.mxu0 %v595
        %v840 = vpop.f32.mrf.mxu0
        %v841 = vadd.f32 %v606, %v840
        %v842 = vpop.f32.mrf.mxu0
        %843 = vmatprep.mubr.f32.mxu0 %v599
        %844 = vmatmul.mubr.f32.gmra.mxu0 %v598
        %v845 = vpop.f32.mrf.mxu0
        %v846 = vadd.f32 %v611, %v845
        %v847 = vpop.f32.mrf.mxu0
        %848 = vdwg.mxu0
        %849 = vmatprep.subr.mxu0 0.0
        %850 = vmatpush1.msra.mxu0 0.0
        %851 = vmatprep.subr.mxu0 0.0
        %852 = vmatpush1.msra.mxu0 0.0
        %853 = vmatprep.subr.mxu0 0.0
        %854 = vmatpush1.msra.mxu0 0.0
        %855 = vmatprep.subr.mxu0 0.0
        %856 = vmatpush1.msra.mxu0 0.0
        %857 = vmatprep.subr.mxu0 0.0
        %858 = vmatpush1.msra.mxu0 0.0
        %859 = vmatprep.subr.mxu0 0.0
        %860 = vmatpush1.msra.mxu0 0.0
        %861 = vmatprep.subr.mxu0 0.0
        %862 = vmatpush1.msra.mxu0 0.0
        %863 = vmatprep.subr.mxu0 0.0
        %864 = vmatpush1.msra.mxu0 0.0
        %865 = vmatprep.subr.mxu0 0.0
        %866 = vmatpush1.msra.mxu0 0.0
        %867 = vmatprep.subr.mxu0 0.0
        %868 = vmatpush1.msra.mxu0 0.0
        %869 = vmatprep.subr.mxu0 0.0
        %870 = vmatpush1.msra.mxu0 0.0
        %871 = vmatprep.subr.mxu0 0.0
        %872 = vmatpush1.msra.mxu0 0.0
        %873 = vmatprep.subr.mxu0 0.0
        %874 = vmatpush1.msra.mxu0 %v594
        %875 = vmatprep.subr.mxu0 0.0
        %876 = vmatpush1.msra.mxu0 %v593
        %877 = vmatprep.subr.mxu0 0.0
        %878 = vmatpush1.msra.mxu0 %v592
        %879 = vmatprep.subr.mxu0 0.0
        %880 = vmatpush1.msra.mxu0 %v591
        %881 = vmatprep.subr.mxu0 0.0
        %882 = vmatpush2.msra.mxu0 0.0
        %883 = vmatprep.subr.mxu0 0.0
        %884 = vmatpush2.msra.mxu0 0.0
        %885 = vmatprep.subr.mxu0 0.0
        %886 = vmatpush2.msra.mxu0 0.0
        %887 = vmatprep.subr.mxu0 0.0
        %888 = vmatpush2.msra.mxu0 0.0
        %889 = vmatprep.subr.mxu0 0.0
        %890 = vmatpush2.msra.mxu0 0.0
        %891 = vmatprep.subr.mxu0 0.0
        %892 = vmatpush2.msra.mxu0 0.0
        %893 = vmatprep.subr.mxu0 0.0
        %894 = vmatpush2.msra.mxu0 0.0
        %895 = vmatprep.subr.mxu0 0.0
        %896 = vmatpush2.msra.mxu0 0.0
        %897 = vmatprep.subr.mxu0 0.0
        %898 = vmatpush2.msra.mxu0 0.0
        %899 = vmatprep.subr.mxu0 0.0
        %900 = vmatpush2.msra.mxu0 0.0
        %901 = vmatprep.subr.mxu0 0.0
        %902 = vmatpush2.msra.mxu0 0.0
        %903 = vmatprep.subr.mxu0 0.0
        %904 = vmatpush2.msra.mxu0 0.0
        %905 = vmatprep.subr.mxu0 0.0
        %906 = vmatpush2.msra.mxu0 0.0
        %907 = vmatprep.subr.mxu0 0.0
        %908 = vmatpush2.msra.mxu0 0.0
        %909 = vmatprep.subr.mxu0 0.0
        %910 = vmatpush2.msra.mxu0 0.0
        %911 = vmatprep.subr.mxu0 0.0
        %912 = vmatpush2.msra.mxu0 0.0
        %913 = vmatprep.mubr.f32.mxu0 0.0
        %914 = vmatmul.mubr.f32.gmra.mxu0 %v615
        %v915 = vpop.f32.mrf.mxu0
        %v916 = vadd.f32 %v841, %v915
        %v917 = vpop.f32.mrf.mxu0
        %918 = vmatprep.mubr.f32.mxu0 0.0
        %919 = vmatmul.mubr.f32.gmra.mxu0 %v618
        %v920 = vpop.f32.mrf.mxu0
        %v921 = vadd.f32 %v846, %v920
        %v922 = vpop.f32.mrf.mxu0
        %923 = vdwg.mxu0
        %v924 = vxor.u32 %v764, 2147483648
        %v925 = vxor.u32 %v766, 2147483648
        %v926 = vxor.u32 %v916, 2147483648
        %v927 = vxor.u32 %v770, 2147483648
        %v928 = vxor.u32 %v772, 2147483648
        %v929 = vxor.u32 %v921, 2147483648
        %v930 = vmul.f32 %v924, 1.442695
        %v931 = vpow.pop %v930
        %v932 = vmul.f32 %v925, 1.442695
        %v933 = vpow.pop %v932
        %v934 = vmul.f32 %v926, 1.442695
        %v935 = vpow.pop %v934
        %v936 = vmul.f32 %v927, 1.442695
        %v937 = vpow.pop %v936
        %v938 = vmul.f32 %v928, 1.442695
        %v939 = vpow.pop %v938
        %v940 = vmul.f32 %v929, 1.442695
        %v941 = vpow.pop %v940
        %v942 = vadd.f32 %v931, 1.0
        %v943 = vadd.f32 %v933, 1.0
        %v944 = vadd.f32 %v935, 1.0
        %v945 = vadd.f32 %v937, 1.0
        %v946 = vadd.f32 %v939, 1.0
        %v947 = vadd.f32 %v941, 1.0
        %v948 = vrcp.pop %v942
        %v949 = vmul.f32 1.0, %v948
        %v950 = vrcp.pop %v943
        %v951 = vmul.f32 1.0, %v950
        %v952 = vrcp.pop %v944
        %v953 = vmul.f32 1.0, %v952
        %v954 = vrcp.pop %v945
        %v955 = vmul.f32 1.0, %v954
        %v956 = vrcp.pop %v946
        %v957 = vmul.f32 1.0, %v956
        %v958 = vrcp.pop %v947
        %v959 = vmul.f32 1.0, %v958
        %v960 = vmul.f32 %v764, %v949
        %v961 = vmul.f32 %v766, %v951
        %v962 = vmul.f32 %v916, %v953
        %v963 = vmul.f32 %v770, %v955
        %v964 = vmul.f32 %v772, %v957
        %v965 = vmul.f32 %v921, %v959
        %v966 = vld [vmem:[%s5] sm:$0x7]
        %v968 = vlaneseq
        %v969 = vshrl.u32 %v968, 7
        %v970 = vsub.s32 0, %v969
        %v971 = vrot.slane %v966, %v970
        %v972 = vlaneseq
        %v973 = vshrl.u32 %v972, 7
        %v974 = vsub.s32 1, %v973
        %v975 = vrot.slane %v966, %v974
        %v976 = vlaneseq
        %v977 = vshrl.u32 %v976, 7
        %v978 = vsub.s32 2, %v977
        %v979 = vrot.slane %v966, %v978
        %v983 = vmul.f32 %v960, %v971
        %v984 = vmul.f32 %v961, %v975
        %v985 = vmul.f32 %v962, %v979
        %v986 = vmul.f32 %v963, %v971
        %v987 = vmul.f32 %v964, %v975
        %v988 = vmul.f32 %v965, %v979
        %989 = vrot.lane.b32.xlu0 %v983, 19
        %v990 = vpop.permute.xlu0 %989
        %991 = vrot.lane.b32.xlu0 %v986, 19
        %v992 = vpop.permute.xlu0 %991
        %993 = vrot.lane.b32.xlu0 %v984, 19
        %v994 = vpop.permute.xlu0 %993
        %995 = vrot.lane.b32.xlu0 %v987, 19
        %v996 = vpop.permute.xlu0 %995
        %997 = vrot.lane.b32.xlu0 %v985, 19
        %v998 = vpop.permute.xlu0 %997
        %999 = vrot.lane.b32.xlu0 %v988, 19
        %v1000 = vpop.permute.xlu0 %999
        %v1001 = vsel %vm323, %v994, %v998
        %v1002 = vsel %vm323, %v996, %v1000
        %v1003 = vsel %vm323, %v990, %v994
        %v1004 = vsel %vm323, %v992, %v996
        %v1005 = vsel %vm323, %v998, %v990
        %v1006 = vsel %vm323, %v1000, %v992
        %1007 = vrot.lane.b32.xlu0 %v983, 18
        %v1008 = vpop.permute.xlu0 %1007
        %1009 = vrot.lane.b32.xlu0 %v986, 18
        %v1010 = vpop.permute.xlu0 %1009
        %1011 = vrot.lane.b32.xlu0 %v984, 18
        %v1012 = vpop.permute.xlu0 %1011
        %1013 = vrot.lane.b32.xlu0 %v987, 18
        %v1014 = vpop.permute.xlu0 %1013
        %1015 = vrot.lane.b32.xlu0 %v985, 18
        %v1016 = vpop.permute.xlu0 %1015
        %1017 = vrot.lane.b32.xlu0 %v988, 18
        %v1018 = vpop.permute.xlu0 %1017
        %v1019 = vsel %vm360, %v1012, %v1016
        %v1020 = vsel %vm360, %v1014, %v1018
        %v1021 = vsel %vm360, %v1008, %v1012
        %v1022 = vsel %vm360, %v1010, %v1014
        %v1023 = vsel %vm360, %v1016, %v1008
        %v1024 = vsel %vm360, %v1018, %v1010
        %1025 = vrot.lane.b32.xlu0 %v983, 17
        %v1026 = vpop.permute.xlu0 %1025
        %1027 = vrot.lane.b32.xlu0 %v986, 17
        %v1028 = vpop.permute.xlu0 %1027
        %1029 = vrot.lane.b32.xlu0 %v984, 17
        %v1030 = vpop.permute.xlu0 %1029
        %1031 = vrot.lane.b32.xlu0 %v987, 17
        %v1032 = vpop.permute.xlu0 %1031
        %1033 = vrot.lane.b32.xlu0 %v985, 17
        %v1034 = vpop.permute.xlu0 %1033
        %1035 = vrot.lane.b32.xlu0 %v988, 17
        %v1036 = vpop.permute.xlu0 %1035
        %v1037 = vsel %vm397, %v1030, %v1034
        %v1038 = vsel %vm397, %v1032, %v1036
        %v1039 = vsel %vm397, %v1026, %v1030
        %v1040 = vsel %vm397, %v1028, %v1032
        %v1041 = vsel %vm397, %v1034, %v1026
        %v1042 = vsel %vm397, %v1036, %v1028
        %1043 = vrot.lane.b32.xlu0 %v983, 1
        %v1044 = vpop.permute.xlu0 %1043
        %1045 = vrot.lane.b32.xlu0 %v986, 1
        %v1046 = vpop.permute.xlu0 %1045
        %1047 = vrot.lane.b32.xlu0 %v984, 1
        %v1048 = vpop.permute.xlu0 %1047
        %1049 = vrot.lane.b32.xlu0 %v987, 1
        %v1050 = vpop.permute.xlu0 %1049
        %1051 = vrot.lane.b32.xlu0 %v985, 1
        %v1052 = vpop.permute.xlu0 %1051
        %1053 = vrot.lane.b32.xlu0 %v988, 1
        %v1054 = vpop.permute.xlu0 %1053
        %v1055 = vsel %vm434, %v1048, %v1052
        %v1056 = vsel %vm434, %v1050, %v1054
        %v1057 = vsel %vm434, %v1044, %v1048
        %v1058 = vsel %vm434, %v1046, %v1050
        %v1059 = vsel %vm434, %v1052, %v1044
        %v1060 = vsel %vm434, %v1054, %v1046
        %1061 = vrot.lane.b32.xlu0 %v983, 127
        %v1062 = vpop.permute.xlu0 %1061
        %1063 = vrot.lane.b32.xlu0 %v986, 127
        %v1064 = vpop.permute.xlu0 %1063
        %1065 = vrot.lane.b32.xlu0 %v984, 127
        %v1066 = vpop.permute.xlu0 %1065
        %1067 = vrot.lane.b32.xlu0 %v987, 127
        %v1068 = vpop.permute.xlu0 %1067
        %1069 = vrot.lane.b32.xlu0 %v985, 127
        %v1070 = vpop.permute.xlu0 %1069
        %1071 = vrot.lane.b32.xlu0 %v988, 127
        %v1072 = vpop.permute.xlu0 %1071
        %v1073 = vsel %vm471, %v1066, %v1070
        %v1074 = vsel %vm471, %v1068, %v1072
        %v1075 = vsel %vm471, %v1062, %v1066
        %v1076 = vsel %vm471, %v1064, %v1068
        %v1077 = vsel %vm471, %v1070, %v1062
        %v1078 = vsel %vm471, %v1072, %v1064
        %1079 = vrot.lane.b32.xlu0 %v983, 111
        %v1080 = vpop.permute.xlu0 %1079
        %1081 = vrot.lane.b32.xlu0 %v986, 111
        %v1082 = vpop.permute.xlu0 %1081
        %1083 = vrot.lane.b32.xlu0 %v984, 111
        %v1084 = vpop.permute.xlu0 %1083
        %1085 = vrot.lane.b32.xlu0 %v987, 111
        %v1086 = vpop.permute.xlu0 %1085
        %1087 = vrot.lane.b32.xlu0 %v985, 111
        %v1088 = vpop.permute.xlu0 %1087
        %1089 = vrot.lane.b32.xlu0 %v988, 111
        %v1090 = vpop.permute.xlu0 %1089
        %v1091 = vsel %vm508, %v1084, %v1088
        %v1092 = vsel %vm508, %v1086, %v1090
        %v1093 = vsel %vm508, %v1080, %v1084
        %v1094 = vsel %vm508, %v1082, %v1086
        %v1095 = vsel %vm508, %v1088, %v1080
        %v1096 = vsel %vm508, %v1090, %v1082
        %1097 = vrot.lane.b32.xlu0 %v983, 110
        %v1098 = vpop.permute.xlu0 %1097
        %1099 = vrot.lane.b32.xlu0 %v986, 110
        %v1100 = vpop.permute.xlu0 %1099
        %1101 = vrot.lane.b32.xlu0 %v984, 110
        %v1102 = vpop.permute.xlu0 %1101
        %1103 = vrot.lane.b32.xlu0 %v987, 110
        %v1104 = vpop.permute.xlu0 %1103
        %1105 = vrot.lane.b32.xlu0 %v985, 110
        %v1106 = vpop.permute.xlu0 %1105
        %1107 = vrot.lane.b32.xlu0 %v988, 110
        %v1108 = vpop.permute.xlu0 %1107
        %v1109 = vsel %vm545, %v1102, %v1106
        %v1110 = vsel %vm545, %v1104, %v1108
        %v1111 = vsel %vm545, %v1098, %v1102
        %v1112 = vsel %vm545, %v1100, %v1104
        %v1113 = vsel %vm545, %v1106, %v1098
        %v1114 = vsel %vm545, %v1108, %v1100
        %1115 = vrot.lane.b32.xlu0 %v983, 109
        %v1116 = vpop.permute.xlu0 %1115
        %1117 = vrot.lane.b32.xlu0 %v986, 109
        %v1118 = vpop.permute.xlu0 %1117
        %1119 = vrot.lane.b32.xlu0 %v984, 109
        %v1120 = vpop.permute.xlu0 %1119
        %1121 = vrot.lane.b32.xlu0 %v987, 109
        %v1122 = vpop.permute.xlu0 %1121
        %1123 = vrot.lane.b32.xlu0 %v985, 109
        %v1124 = vpop.permute.xlu0 %1123
        %1125 = vrot.lane.b32.xlu0 %v988, 109
        %v1126 = vpop.permute.xlu0 %1125
        %v1127 = vsel %vm582, %v1120, %v1124
        %v1128 = vsel %vm582, %v1122, %v1126
        %v1129 = vsel %vm582, %v1116, %v1120
        %v1130 = vsel %vm582, %v1118, %v1122
        %v1131 = vsel %vm582, %v1124, %v1116
        %v1132 = vsel %vm582, %v1126, %v1118
        %v1133 = vld [vmem:[#allocation5] sm:$0xff]
        %v1134 = vld [vmem:[#allocation5 + $0x8] sm:$0xff]
        %v1135 = vld [vmem:[#allocation5 + $0x10] sm:$0xff]
        %v1136 = vld [vmem:[#allocation5 + $0x18] sm:$0xff]
        %v1137 = vld [vmem:[#allocation5 + $0x20] sm:$0xff]
        %v1138 = vld [vmem:[#allocation5 + $0x28] sm:$0xff]
        %v1139 = vld [vmem:[#allocation5 + $0x30] sm:$0xff]
        %v1140 = vld [vmem:[#allocation5 + $0x38] sm:$0xff]
        %v1141 = vld [vmem:[%s4] sm:$0xff]
        %v1142 = vld [vmem:[%s4 + $0x8] sm:$0xff]
        %v1143 = vld [vmem:[%s4 + $0x10] sm:$0xff]
        %v1144 = vld [vmem:[%s4 + $0x18] sm:$0xff]
        %1146 = vset.pattern.permute.xlu0 0
        %1147 = vperm.xlu0 %1146, %v1141
        %v1148 = vpop.permute.xlu0 %1147
        %1151 = vset.pattern.permute.xlu0 0
        %1152 = vperm.xlu0 %1151, %v1142
        %v1153 = vpop.permute.xlu0 %1152
        %1156 = vset.pattern.permute.xlu0 0
        %1157 = vperm.xlu0 %1156, %v1143
        %v1158 = vpop.permute.xlu0 %1157
        %1161 = vset.pattern.permute.xlu0 0
        %1162 = vperm.xlu0 %1161, %v1144
        %v1163 = vpop.permute.xlu0 %1162
        %vm1165 = vcmask 130048
        %v1167 = vsel %vm1165, %v1134, 0
        %v1170 = vsel %vm1165, %v1136, 0
        %v1173 = vsel %vm1165, %v1138, 0
        %v1176 = vsel %vm1165, %v1140, 0
        %1178 = vmatprep.subr.mxu0 %v1110
        %1179 = vmatpush1.msra.mxu0 %v1112
        %1180 = vmatprep.subr.mxu0 %v1109
        %1181 = vmatpush1.msra.mxu0 %v1111
        %1182 = vmatprep.subr.mxu0 %v1092
        %1183 = vmatpush1.msra.mxu0 %v1094
        %1184 = vmatprep.subr.mxu0 %v1091
        %1185 = vmatpush1.msra.mxu0 %v1093
        %1186 = vmatprep.subr.mxu0 %v1074
        %1187 = vmatpush1.msra.mxu0 %v1076
        %1188 = vmatprep.subr.mxu0 %v1073
        %1189 = vmatpush1.msra.mxu0 %v1075
        %1190 = vmatprep.subr.mxu0 %v987
        %1191 = vmatpush1.msra.mxu0 %v986
        %1192 = vmatprep.subr.mxu0 %v984
        %1193 = vmatpush1.msra.mxu0 %v983
        %1194 = vmatprep.subr.mxu0 %v1058
        %1195 = vmatpush1.msra.mxu0 %v1060
        %1196 = vmatprep.subr.mxu0 %v1057
        %1197 = vmatpush1.msra.mxu0 %v1059
        %1198 = vmatprep.subr.mxu0 %v1040
        %1199 = vmatpush1.msra.mxu0 %v1042
        %1200 = vmatprep.subr.mxu0 %v1039
        %1201 = vmatpush1.msra.mxu0 %v1041
        %1202 = vmatprep.subr.mxu0 %v1022
        %1203 = vmatpush1.msra.mxu0 %v1024
        %1204 = vmatprep.subr.mxu0 %v1021
        %1205 = vmatpush1.msra.mxu0 %v1023
        %1206 = vmatprep.subr.mxu0 %v1004
        %1207 = vmatpush1.msra.mxu0 %v1006
        %1208 = vmatprep.subr.mxu0 %v1003
        %1209 = vmatpush1.msra.mxu0 %v1005
        %1210 = vmatprep.subr.mxu0 0.0
        %1211 = vmatpush2.msra.mxu0 0.0
        %1212 = vmatprep.subr.mxu0 0.0
        %1213 = vmatpush2.msra.mxu0 0.0
        %1214 = vmatprep.subr.mxu0 0.0
        %1215 = vmatpush2.msra.mxu0 0.0
        %1216 = vmatprep.subr.mxu0 0.0
        %1217 = vmatpush2.msra.mxu0 0.0
        %1218 = vmatprep.subr.mxu0 0.0
        %1219 = vmatpush2.msra.mxu0 0.0
        %1220 = vmatprep.subr.mxu0 0.0
        %1221 = vmatpush2.msra.mxu0 0.0
        %1222 = vmatprep.subr.mxu0 0.0
        %1223 = vmatpush2.msra.mxu0 0.0
        %1224 = vmatprep.subr.mxu0 0.0
        %1225 = vmatpush2.msra.mxu0 0.0
        %1226 = vmatprep.subr.mxu0 0.0
        %1227 = vmatpush2.msra.mxu0 0.0
        %1228 = vmatprep.subr.mxu0 0.0
        %1229 = vmatpush2.msra.mxu0 0.0
        %1230 = vmatprep.subr.mxu0 0.0
        %1231 = vmatpush2.msra.mxu0 0.0
        %1232 = vmatprep.subr.mxu0 0.0
        %1233 = vmatpush2.msra.mxu0 0.0
        %1234 = vmatprep.subr.mxu0 0.0
        %1235 = vmatpush2.msra.mxu0 0.0
        %1236 = vmatprep.subr.mxu0 0.0
        %1237 = vmatpush2.msra.mxu0 0.0
        %1238 = vmatprep.subr.mxu0 %v1128
        %1239 = vmatpush2.msra.mxu0 %v1130
        %1240 = vmatprep.subr.mxu0 %v1127
        %1241 = vmatpush2.msra.mxu0 %v1129
        %1242 = vmatprep.mubr.f32.mxu0 %v1167
        %1243 = vmatmul.mubr.f32.gmra.mxu0 %v1133
        %v1244 = vpop.f32.mrf.mxu0
        %v1245 = vadd.f32 %v1148, %v1244
        %v1246 = vpop.f32.mrf.mxu0
        %v1247 = vadd.f32 %v1148, %v1246
        %1248 = vmatprep.mubr.f32.mxu0 %v1170
        %1249 = vmatmul.mubr.f32.gmra.mxu0 %v1135
        %v1250 = vpop.f32.mrf.mxu0
        %v1251 = vadd.f32 %v1153, %v1250
        %v1252 = vpop.f32.mrf.mxu0
        %v1253 = vadd.f32 %v1153, %v1252
        %1254 = vmatprep.mubr.f32.mxu0 %v1173
        %1255 = vmatmul.mubr.f32.gmra.mxu0 %v1137
        %v1256 = vpop.f32.mrf.mxu0
        %v1257 = vadd.f32 %v1158, %v1256
        %v1258 = vpop.f32.mrf.mxu0
        %v1259 = vadd.f32 %v1158, %v1258
        %1260 = vmatprep.mubr.f32.mxu0 %v1176
        %1261 = vmatmul.mubr.f32.gmra.mxu0 %v1139
        %v1262 = vpop.f32.mrf.mxu0
        %v1263 = vadd.f32 %v1163, %v1262
        %v1264 = vpop.f32.mrf.mxu0
        %v1265 = vadd.f32 %v1163, %v1264
        %1266 = vdwg.mxu0
        %1267 = vmatprep.subr.mxu0 0.0
        %1268 = vmatpush1.msra.mxu0 %v1114
        %1269 = vmatprep.subr.mxu0 0.0
        %1270 = vmatpush1.msra.mxu0 %v1113
        %1271 = vmatprep.subr.mxu0 0.0
        %1272 = vmatpush1.msra.mxu0 %v1096
        %1273 = vmatprep.subr.mxu0 0.0
        %1274 = vmatpush1.msra.mxu0 %v1095
        %1275 = vmatprep.subr.mxu0 0.0
        %1276 = vmatpush1.msra.mxu0 %v1078
        %1277 = vmatprep.subr.mxu0 0.0
        %1278 = vmatpush1.msra.mxu0 %v1077
        %1279 = vmatprep.subr.mxu0 0.0
        %1280 = vmatpush1.msra.mxu0 %v988
        %1281 = vmatprep.subr.mxu0 0.0
        %1282 = vmatpush1.msra.mxu0 %v985
        %1283 = vmatprep.subr.mxu0 0.0
        %1284 = vmatpush1.msra.mxu0 %v1056
        %1285 = vmatprep.subr.mxu0 0.0
        %1286 = vmatpush1.msra.mxu0 %v1055
        %1287 = vmatprep.subr.mxu0 0.0
        %1288 = vmatpush1.msra.mxu0 %v1038
        %1289 = vmatprep.subr.mxu0 0.0
        %1290 = vmatpush1.msra.mxu0 %v1037
        %1291 = vmatprep.subr.mxu0 0.0
        %1292 = vmatpush1.msra.mxu0 %v1020
        %1293 = vmatprep.subr.mxu0 0.0
        %1294 = vmatpush1.msra.mxu0 %v1019
        %1295 = vmatprep.subr.mxu0 0.0
        %1296 = vmatpush1.msra.mxu0 %v1002
        %1297 = vmatprep.subr.mxu0 0.0
        %1298 = vmatpush1.msra.mxu0 %v1001
        %1299 = vmatprep.subr.mxu0 0.0
        %1300 = vmatpush2.msra.mxu0 0.0
        %1301 = vmatprep.subr.mxu0 0.0
        %1302 = vmatpush2.msra.mxu0 0.0
        %1303 = vmatprep.subr.mxu0 0.0
        %1304 = vmatpush2.msra.mxu0 0.0
        %1305 = vmatprep.subr.mxu0 0.0
        %1306 = vmatpush2.msra.mxu0 0.0
        %1307 = vmatprep.subr.mxu0 0.0
        %1308 = vmatpush2.msra.mxu0 0.0
        %1309 = vmatprep.subr.mxu0 0.0
        %1310 = vmatpush2.msra.mxu0 0.0
        %1311 = vmatprep.subr.mxu0 0.0
        %1312 = vmatpush2.msra.mxu0 0.0
        %1313 = vmatprep.subr.mxu0 0.0
        %1314 = vmatpush2.msra.mxu0 0.0
        %1315 = vmatprep.subr.mxu0 0.0
        %1316 = vmatpush2.msra.mxu0 0.0
        %1317 = vmatprep.subr.mxu0 0.0
        %1318 = vmatpush2.msra.mxu0 0.0
        %1319 = vmatprep.subr.mxu0 0.0
        %1320 = vmatpush2.msra.mxu0 0.0
        %1321 = vmatprep.subr.mxu0 0.0
        %1322 = vmatpush2.msra.mxu0 0.0
        %1323 = vmatprep.subr.mxu0 0.0
        %1324 = vmatpush2.msra.mxu0 0.0
        %1325 = vmatprep.subr.mxu0 0.0
        %1326 = vmatpush2.msra.mxu0 0.0
        %1327 = vmatprep.subr.mxu0 0.0
        %1328 = vmatpush2.msra.mxu0 %v1132
        %1329 = vmatprep.subr.mxu0 0.0
        %1330 = vmatpush2.msra.mxu0 %v1131
        %1331 = vmatprep.mubr.f32.mxu0 %v1167
        %1332 = vmatmul.mubr.f32.gmra.mxu0 %v1133
        %v1333 = vpop.f32.mrf.mxu0
        %v1334 = vadd.f32 %v1148, %v1333
        %v1335 = vpop.f32.mrf.mxu0
        %1336 = vmatprep.mubr.f32.mxu0 %v1170
        %1337 = vmatmul.mubr.f32.gmra.mxu0 %v1135
        %v1338 = vpop.f32.mrf.mxu0
        %v1339 = vadd.f32 %v1153, %v1338
        %v1340 = vpop.f32.mrf.mxu0
        %1341 = vmatprep.mubr.f32.mxu0 %v1173
        %1342 = vmatmul.mubr.f32.gmra.mxu0 %v1137
        %v1343 = vpop.f32.mrf.mxu0
        %v1344 = vadd.f32 %v1158, %v1343
        %v1345 = vpop.f32.mrf.mxu0
        %1346 = vmatprep.mubr.f32.mxu0 %v1176
        %1347 = vmatmul.mubr.f32.gmra.mxu0 %v1139
        %v1348 = vpop.f32.mrf.mxu0
        %v1349 = vadd.f32 %v1163, %v1348
        %v1350 = vpop.f32.mrf.mxu0
        %1351 = vdwg.mxu0
        %v1352 = vxor.u32 %v1245, 2147483648
        %v1353 = vxor.u32 %v1247, 2147483648
        %v1354 = vxor.u32 %v1334, 2147483648
        %v1355 = vxor.u32 %v1251, 2147483648
        %v1356 = vxor.u32 %v1253, 2147483648
        %v1357 = vxor.u32 %v1339, 2147483648
        %v1358 = vxor.u32 %v1257, 2147483648
        %v1359 = vxor.u32 %v1259, 2147483648
        %v1360 = vxor.u32 %v1344, 2147483648
        %v1361 = vxor.u32 %v1263, 2147483648
        %v1362 = vxor.u32 %v1265, 2147483648
        %v1363 = vxor.u32 %v1349, 2147483648
        %v1364 = vmul.f32 %v1352, 1.442695
        %v1365 = vpow.pop %v1364
        %v1366 = vmul.f32 %v1353, 1.442695
        %v1367 = vpow.pop %v1366
        %v1368 = vmul.f32 %v1354, 1.442695
        %v1369 = vpow.pop %v1368
        %v1370 = vmul.f32 %v1355, 1.442695
        %v1371 = vpow.pop %v1370
        %v1372 = vmul.f32 %v1356, 1.442695
        %v1373 = vpow.pop %v1372
        %v1374 = vmul.f32 %v1357, 1.442695
        %v1375 = vpow.pop %v1374
        %v1376 = vmul.f32 %v1358, 1.442695
        %v1377 = vpow.pop %v1376
        %v1378 = vmul.f32 %v1359, 1.442695
        %v1379 = vpow.pop %v1378
        %v1380 = vmul.f32 %v1360, 1.442695
        %v1381 = vpow.pop %v1380
        %v1382 = vmul.f32 %v1361, 1.442695
        %v1383 = vpow.pop %v1382
        %v1384 = vmul.f32 %v1362, 1.442695
        %v1385 = vpow.pop %v1384
        %v1386 = vmul.f32 %v1363, 1.442695
        %v1387 = vpow.pop %v1386
        %v1388 = vadd.f32 %v1365, 1.0
        %v1389 = vadd.f32 %v1367, 1.0
        %v1390 = vadd.f32 %v1369, 1.0
        %v1391 = vadd.f32 %v1371, 1.0
        %v1392 = vadd.f32 %v1373, 1.0
        %v1393 = vadd.f32 %v1375, 1.0
        %v1394 = vadd.f32 %v1377, 1.0
        %v1395 = vadd.f32 %v1379, 1.0
        %v1396 = vadd.f32 %v1381, 1.0
        %v1397 = vadd.f32 %v1383, 1.0
        %v1398 = vadd.f32 %v1385, 1.0
        %v1399 = vadd.f32 %v1387, 1.0
        %v1400 = vrcp.pop %v1388
        %v1401 = vmul.f32 1.0, %v1400
        %v1402 = vrcp.pop %v1389
        %v1403 = vmul.f32 1.0, %v1402
        %v1404 = vrcp.pop %v1390
        %v1405 = vmul.f32 1.0, %v1404
        %v1406 = vrcp.pop %v1391
        %v1407 = vmul.f32 1.0, %v1406
        %v1408 = vrcp.pop %v1392
        %v1409 = vmul.f32 1.0, %v1408
        %v1410 = vrcp.pop %v1393
        %v1411 = vmul.f32 1.0, %v1410
        %v1412 = vrcp.pop %v1394
        %v1413 = vmul.f32 1.0, %v1412
        %v1414 = vrcp.pop %v1395
        %v1415 = vmul.f32 1.0, %v1414
        %v1416 = vrcp.pop %v1396
        %v1417 = vmul.f32 1.0, %v1416
        %v1418 = vrcp.pop %v1397
        %v1419 = vmul.f32 1.0, %v1418
        %v1420 = vrcp.pop %v1398
        %v1421 = vmul.f32 1.0, %v1420
        %v1422 = vrcp.pop %v1399
        %v1423 = vmul.f32 1.0, %v1422
        %v1424 = vmul.f32 %v1245, %v1401
        %v1425 = vmul.f32 %v1247, %v1403
        %v1426 = vmul.f32 %v1334, %v1405
        %v1427 = vmul.f32 %v1251, %v1407
        %v1428 = vmul.f32 %v1253, %v1409
        %v1429 = vmul.f32 %v1339, %v1411
        %v1430 = vmul.f32 %v1257, %v1413
        %v1431 = vmul.f32 %v1259, %v1415
        %v1432 = vmul.f32 %v1344, %v1417
        %v1433 = vmul.f32 %v1263, %v1419
        %v1434 = vmul.f32 %v1265, %v1421
        %v1435 = vmul.f32 %v1349, %v1423
        %v1436 = vadd.f32 %v1424, %v285
        %v1437 = vadd.f32 %v1425, %v286
        %v1438 = vadd.f32 %v1426, %v287
        %v1439 = vadd.f32 %v1427, %v288
        %v1440 = vadd.f32 %v1428, %v289
        %v1441 = vadd.f32 %v1429, %v290
        %v1442 = vadd.f32 %v1430, %v291
        %v1443 = vadd.f32 %v1431, %v292
        %v1444 = vadd.f32 %v1432, %v293
        %v1445 = vadd.f32 %v1433, %v294
        %v1446 = vadd.f32 %v1434, %v295
        %v1447 = vadd.f32 %v1435, %v296
        %1448 = vst [vmem:[%s284] sm:$0xff] %v1436
        %1449 = vst [vmem:[%s284 + $0x8] sm:$0xff] %v1437
        %1450 = vst [vmem:[%s284 + $0x10] sm:$0xff] %v1438
        %1451 = vst [vmem:[%s284 + $0x18] sm:$0xff] %v1439
        %1452 = vst [vmem:[%s284 + $0x20] sm:$0xff] %v1440
        %1453 = vst [vmem:[%s284 + $0x28] sm:$0xff] %v1441
        %1454 = vst [vmem:[%s284 + $0x30] sm:$0xff] %v1442
        %1455 = vst [vmem:[%s284 + $0x38] sm:$0xff] %v1443
        %1456 = vst [vmem:[%s284 + $0x40] sm:$0xff] %v1444
        %1457 = vst [vmem:[%s284 + $0x48] sm:$0xff] %v1445
        %1458 = vst [vmem:[%s284 + $0x50] sm:$0xff] %v1446
        %1459 = vst [vmem:[%s284 + $0x58] sm:$0xff] %v1447
        %s1460 = sand.u32 %s163, 1
        %s1461 = scalar_lea.sflag [#allocation4], %s1460
        %s1462 = sand.u32 %s163, 1
        %s1463 = smul.addr %s1462, 96
        %s1464 = scalar_lea.vmem [#allocation7], %s1463
        // Predicated region
        $region53: #{tpu_custom_call.1} parent=43 // pred_check
          %p1465 = pneg %p173
        $region54: #{tpu_custom_call.1} parent=43 // pred_check_branch
          %1467 = sbr.rel (%p1465) target = $region56
        $region55: #{tpu_custom_call.1} parent=43 // pred_region
          %s1469 = ssub.s32 1536, 1536
          %1470 = vsyncadd %s1461, %s1469
          %s1471 = smul.addr %s24, 12
          %s1472 = smul.addr %s1471, 128
          %s1473 = scalar_lea.hbm %s6, %s1472
          %s1474 = sshll.u32 %s1464, 4
          %s1475 = int_to_ptr.vmem [resolvable:$true] %s1474
          %1480 = dma.vmem_to_hbm [thread:$0]  %s1475, 1536, %s1473, %s1461, 384, 384, 24
        $region56: #{tpu_custom_call.1} parent=43 // pred_fallthru
          _
      $region44: #{tpu_custom_call.1} parent=5 // pred_fallthru
        _
      %p1481 = scmp.le.s32.totalorder 2, %s19
      // Predicated region
      $region57: #{tpu_custom_call.1} parent=5 // pred_check
        %p1482 = pneg %p1481
      $region58: #{tpu_custom_call.1} parent=5 // pred_check_branch
        %1484 = sbr.rel (%p1482) target = $region60
      $region59: #{tpu_custom_call.1} parent=5 // pred_region
        %s1485 = ssub.s32 %s19, 2
        // Predicated region
        $region61: #{tpu_custom_call.1} parent=59 // pred_check
          %p1486 = pneg %p179
        $region62: #{tpu_custom_call.1} parent=59 // pred_check_branch
          %1488 = sbr.rel (%p1486) target = $region64
        $region63: #{tpu_custom_call.1} parent=59 // pred_region
          %s1489 = sand.u32 %s164, 1
          %s1490 = scalar_lea.sflag [#allocation4], %s1489
          %s1491 = sand.u32 %s164, 1
          %s1492 = smul.addr %s1491, 96
          %s1493 = scalar_lea.vmem [#allocation7], %s1492
          %1494 = dma.done %s1490, 1536
        $region64: #{tpu_custom_call.1} parent=59 // pred_fallthru
          _
      $region60: #{tpu_custom_call.1} parent=5 // pred_fallthru
        _
    $region6: #{tpu_custom_call.1} parent=1 // loop_footer
      %s23 = sadd.s32 1, %s19
    $region7: #{tpu_custom_call.1} parent=1 // loop_footer_branch
      %18 = sbr.rel target = $region3
    $region8: #{tpu_custom_call.1} parent=1 // loop_exit
      _
    %1495 = vsyncpa [#allocation3], 1
    %s1496 = scalar_lea.sflag [#allocation3], 1
    %1497 = vsyncpa %s1496, 1
    %1498 = vsyncpa [#allocation6], 1
    %1499 = vsyncpa [#allocation4], 1
    %s1500 = scalar_lea.sflag [#allocation4], 1
    %1501 = vsyncpa %s1500, 1

</llo_original>
